<compile_context>
chip_gen: v6e
topology: v6e:2x2x1
jax: 0.10.0
libtpu: 0.0.40
codegen_flags: <defaults>
</compile_context>

<pallas_src>
import math

import jax
import jax.numpy as jnp
from jax.experimental import pallas as pl
from jax.experimental.pallas import tpu as pltpu


# ---------------------------------------------------------------------------
# Trace-time hardware queries (perf-only; safe fallbacks).
# ---------------------------------------------------------------------------
def _has_bf16_eup():
    """v6e / v7x have bf16 EUP transcendentals; v2-v5 do not."""
    try:
        kind = jax.devices()[0].device_kind.lower()
    except Exception:
        return False
    return not any(v in kind for v in ("v2", "v3", "v4", "v5"))


def _vmem_limit_bytes():
    """Raise the scoped-VMEM limit toward physical capacity (with headroom)."""
    try:
        return int(pltpu.get_tpu_info().vmem_capacity_bytes * 0.85)
    except Exception:
        return 48 * 1024 * 1024


# ---------------------------------------------------------------------------
# In-kernel math helpers (traced inside the Pallas kernel body).
# ---------------------------------------------------------------------------
def _layernorm(v, w, b, eps=1e-6):
    mu = jnp.mean(v, axis=-1, keepdims=True)
    var = jnp.mean(jnp.square(v - mu), axis=-1, keepdims=True)
    return (v - mu) * jax.lax.rsqrt(var + eps) * w + b


def _gelu_exact(v):
    # PyTorch nn.GELU() default == exact erf GELU.
    # TODO(synk): on v6e/v7x a tanh-approx GELU would move this onto the EUP slot
    # (frees VALU on the (N, 4C) slab); kept exact to match the PyTorch numerics.
    return 0.5 * v * (1.0 + jax.lax.erf(v * (1.0 / math.sqrt(2.0))))


# ---------------------------------------------------------------------------
# Fused depth-stack kernel: grid = (B, depth), depth innermost / "arbitrary".
# ---------------------------------------------------------------------------
def make_stack_kernel(width, num_heads, end_norm, bf16_exp):
    head_dim = width // num_heads

    def kernel(x_ref, ln1w, ln1b, wqkv, bqkv, wproj, bproj,
               ln2w, ln2b, wfc1, bfc1, wfc2, bfc2, normw, normb, o_ref):
        d = pl.program_id(1)
        last_d = pl.num_programs(1) - 1

        # The (1, N, C) output block is resident across the depth axis (same block
        # index for every d): it carries the activation. Seed it from x at d == 0.
        @pl.when(d == 0)
        def _():
            o_ref[...] = x_ref[...]

        x = o_ref[0].astype(jnp.float32)                        # (N, C) f32
        n_tok = x.shape[0]

        # --- attention branch -------------------------------------------------
        h = _layernorm(x, ln1w[0, 0], ln1b[0, 0]).astype(jnp.bfloat16)
        # One lane-dense qkv matmul (bf16 in, f32 accumulate). The attention scale
        # head_dim**-0.5 was pre-folded into the q columns of wqkv/bqkv.
        qkv = jnp.dot(h, wqkv[0], preferred_element_type=jnp.float32) + bqkv[0, 0]
        qkv = qkv.astype(jnp.bfloat16)                          # cast BEFORE relayout

        def to_heads(t):                                        # (N, Cpart) -> (H, N, D)
            return jnp.transpose(t.reshape(n_tok, num_heads, head_dim), (1, 0, 2))

        q = to_heads(qkv[:, :width])
        k = to_heads(qkv[:, width:2 * width])
        v = to_heads(qkv[:, 2 * width:])
        # TODO(synk): materialize k directly as (H, D, N) here if the lowered MLIR
        # shows an extra vxpose feeding the score einsum.

        # Batched over heads; contraction over head_dim.
        s = jnp.einsum('hqd,hkd->hqk', q, k,
                       preferred_element_type=jnp.float32)      # (H, N, N) f32
        s = s - jnp.max(s, axis=-1, keepdims=True)
        if bf16_exp:
            # v6e/v7x: bf16 EUP exp; exponents are <= 0 after max-subtraction.
            p = jnp.exp(s.astype(jnp.bfloat16))                 # bf16
            denom = jnp.sum(p.astype(jnp.float32), axis=-1, keepdims=True)
        else:
            p = jnp.exp(s)                                      # f32 (no bf16 EUP)
            denom = jnp.sum(p, axis=-1, keepdims=True)
            p = p.astype(jnp.bfloat16)
        o = jnp.einsum('hqk,hkd->hqd', p, v,
                       preferred_element_type=jnp.float32)      # (H, N, D) f32
        # Normalize AFTER p@v: scales (H,N,D) instead of (H,N,N); EUP reciprocal.
        o = o * pl.reciprocal(denom, approx=True)

        attn = jnp.transpose(o.astype(jnp.bfloat16), (1, 0, 2)).reshape(n_tok, width)
        attn = jnp.dot(attn, wproj[0],
                       preferred_element_type=jnp.float32) + bproj[0, 0]
        x = x + attn

        # --- MLP branch ---------------------------------------------------------
        h2 = _layernorm(x, ln2w[0, 0], ln2b[0, 0]).astype(jnp.bfloat16)
        m = jnp.dot(h2, wfc1[0], preferred_element_type=jnp.float32) + bfc1[0, 0]
        m = _gelu_exact(m).astype(jnp.bfloat16)                 # GELU in f32, cast for MXU
        m = jnp.dot(m, wfc2[0], preferred_element_type=jnp.float32) + bfc2[0, 0]
        y = x + m

        if end_norm:
            # Fuse the final LayerNorm into the last depth step.
            @pl.when(d == last_d)
            def _():
                o_ref[0] = _layernorm(y, normw[0], normb[0]).astype(o_ref.dtype)

            @pl.when(d != last_d)
            def _():
                o_ref[0] = y.astype(o_ref.dtype)
        else:
            o_ref[0] = y.astype(o_ref.dtype)

    return kernel


def _norm_kernel(x_ref, w, b, o_ref):
    o_ref[0] = _layernorm(x_ref[0], w[0], b[0])


# ---------------------------------------------------------------------------
# Parameter prep (call ONCE at model-build time, not per forward).
# ---------------------------------------------------------------------------
def prepare_params(block_params, num_heads):
    """Stack per-block params on a leading depth axis, fold the attention scale into
    the q columns of wqkv/bqkv, and cast matmul weights to bf16."""
    if not block_params:
        return None

    def stack(name):
        return jnp.stack([p[name] for p in block_params], axis=0)

    wqkv = stack("wqkv")                                # (depth, C, 3C)
    bqkv = stack("bqkv")                                # (depth, 1, 3C)
    C = wqkv.shape[1]
    scale = (C // num_heads) ** -0.5
    wqkv = wqkv.at[:, :, :C].multiply(scale)
    bqkv = bqkv.at[:, :, :C].multiply(scale)
    return dict(
        ln1w=stack("ln1w"), ln1b=stack("ln1b"),         # (depth, 1, C)
        wqkv=wqkv.astype(jnp.bfloat16), bqkv=bqkv,
        wproj=stack("wproj").astype(jnp.bfloat16), bproj=stack("bproj"),
        ln2w=stack("ln2w"), ln2b=stack("ln2b"),
        wfc1=stack("wfc1").astype(jnp.bfloat16), bfc1=stack("bfc1"),
        wfc2=stack("wfc2").astype(jnp.bfloat16), bfc2=stack("bfc2"),
    )


# ---------------------------------------------------------------------------
# Wrappers
# ---------------------------------------------------------------------------
def final_norm_forward(x, w, b):
    """Standalone final LayerNorm (only used when depth == 0)."""
    B, N, C = x.shape
    return pl.pallas_call(
        _norm_kernel,
        out_shape=jax.ShapeDtypeStruct((B, N, C), x.dtype),
        grid=(B,),
        in_specs=[
            pl.BlockSpec((1, N, C), lambda bb: (bb, 0, 0)),
            pl.BlockSpec((1, C), lambda bb: (0, 0)),
            pl.BlockSpec((1, C), lambda bb: (0, 0)),
        ],
        out_specs=pl.BlockSpec((1, N, C), lambda bb: (bb, 0, 0)),
        compiler_params=pltpu.CompilerParams(dimension_semantics=("parallel",)),
    )(x, w, b)


def vit_blocks_forward(x, stacked, norm_w, norm_b, num_heads, end_norm=True):
    """Full ViT block stack (+ optional final LayerNorm) in one pallas_call."""
    B, N, C = x.shape
    if stacked is None:
        return final_norm_forward(x, norm_w, norm_b) if end_norm else x

    depth = stacked["wqkv"].shape[0]
    H = stacked["wfc1"].shape[2]
    if norm_w is None:
        norm_w = jnp.ones((1, C), jnp.float32)
        norm_b = jnp.zeros((1, C), jnp.float32)

    kernel = make_stack_kernel(C, num_heads, end_norm, _has_bf16_eup())

    def dspec(shape):
        # Per-depth weight: block covers one depth slice; index_map advances with d
        # so the auto-pipeline double-buffers block d+1's weights behind block d.
        nd = len(shape)
        return pl.BlockSpec((1,) + tuple(shape[1:]),
                            lambda b, d, _nd=nd: (d,) + (0,) * (_nd - 1))

    def rep_spec(shape):
        nd = len(shape)
        return pl.BlockSpec(tuple(shape), lambda b, d, _nd=nd: (0,) * _nd)

    in_specs = [
        pl.BlockSpec((1, N, C), lambda b, d: (b, 0, 0)),        # x (read only at d==0)
        dspec((depth, 1, C)), dspec((depth, 1, C)),             # ln1 w/b
        dspec((depth, C, 3 * C)), dspec((depth, 1, 3 * C)),     # qkv (bf16 W, f32 b)
        dspec((depth, C, C)), dspec((depth, 1, C)),             # proj
        dspec((depth, 1, C)), dspec((depth, 1, C)),             # ln2 w/b
        dspec((depth, C, H)), dspec((depth, 1, H)),             # fc1
        dspec((depth, H, C)), dspec((depth, 1, C)),             # fc2
        rep_spec((1, C)), rep_spec((1, C)),                     # final norm w/b
    ]
    args = [x,
            stacked["ln1w"], stacked["ln1b"],
            stacked["wqkv"], stacked["bqkv"],
            stacked["wproj"], stacked["bproj"],
            stacked["ln2w"], stacked["ln2b"],
            stacked["wfc1"], stacked["bfc1"],
            stacked["wfc2"], stacked["bfc2"],
            norm_w, norm_b]

    return pl.pallas_call(
        kernel,
        out_shape=jax.ShapeDtypeStruct((B, N, C), x.dtype),
        grid=(B, depth),
        in_specs=in_specs,
        out_specs=pl.BlockSpec((1, N, C), lambda b, d: (b, 0, 0)),
        compiler_params=pltpu.CompilerParams(
            dimension_semantics=("parallel", "arbitrary"),
            vmem_limit_bytes=_vmem_limit_bytes(),
        ),
    )(*args)


# ---------------------------------------------------------------------------
# Pure-JAX f32 reference (same math, no Pallas) for a correctness check.
# ---------------------------------------------------------------------------
def ref_forward(x, block_params, norm_w, norm_b, num_heads, end_norm=True):
    B, N, C = x.shape
    head_dim = C // num_heads
    scale = head_dim ** -0.5

    def ln(v, w, b):
        mu = jnp.mean(v, axis=-1, keepdims=True)
        var = jnp.mean(jnp.square(v - mu), axis=-1, keepdims=True)
        return (v - mu) * jax.lax.rsqrt(var + 1e-6) * w + b

    for p in block_params:
        h = ln(x, p["ln1w"][0], p["ln1b"][0])
        qkv = h @ p["wqkv"] + p["bqkv"][0]
        q, k, v = qkv[..., :C], qkv[..., C:2 * C], qkv[..., 2 * C:]
        q = q.reshape(B, N, num_heads, head_dim).transpose(0, 2, 1, 3) * scale
        k = k.reshape(B, N, num_heads, head_dim).transpose(0, 2, 1, 3)
        v = v.reshape(B, N, num_heads, head_dim).transpose(0, 2, 1, 3)
        s = jnp.einsum("bhqd,bhkd->bhqk", q, k)
        s = s - jnp.max(s, axis=-1, keepdims=True)
        pr = jnp.exp(s)
        pr = pr / jnp.sum(pr, axis=-1, keepdims=True)
        attn = jnp.einsum("bhqk,bhkd->bhqd", pr, v)
        attn = attn.transpose(0, 2, 1, 3).reshape(B, N, C)
        x = x + (attn @ p["wproj"] + p["bproj"][0])
        h2 = ln(x, p["ln2w"][0], p["ln2b"][0])
        m = h2 @ p["wfc1"] + p["bfc1"][0]
        m = 0.5 * m * (1.0 + jax.lax.erf(m / math.sqrt(2.0)))
        x = x + (m @ p["wfc2"] + p["bfc2"][0])
    if end_norm:
        x = ln(x, norm_w[0], norm_b[0])
    return x


# ---------------------------------------------------------------------------
# Deterministic parameter construction (synthetic, no checkpoint loading).
# ---------------------------------------------------------------------------
def init_params(key, width, depth, mlp_ratio=4):
    hidden = width * mlp_ratio
    blocks = []
    for _ in range(depth):
        key, *ks = jax.random.split(key, 5)
        blocks.append(dict(
            ln1w=jnp.ones((1, width), jnp.float32),
            ln1b=jnp.zeros((1, width), jnp.float32),
            wqkv=0.02 * jax.random.normal(ks[0], (width, 3 * width), jnp.float32),
            bqkv=jnp.zeros((1, 3 * width), jnp.float32),
            wproj=0.02 * jax.random.normal(ks[1], (width, width), jnp.float32),
            bproj=jnp.zeros((1, width), jnp.float32),
            ln2w=jnp.ones((1, width), jnp.float32),
            ln2b=jnp.zeros((1, width), jnp.float32),
            wfc1=0.02 * jax.random.normal(ks[2], (width, hidden), jnp.float32),
            bfc1=jnp.zeros((1, hidden), jnp.float32),
            wfc2=0.02 * jax.random.normal(ks[3], (hidden, width), jnp.float32),
            bfc2=jnp.zeros((1, width), jnp.float32),
        ))
    norm_w = jnp.ones((1, width), jnp.float32)
    norm_b = jnp.zeros((1, width), jnp.float32)
    return blocks, norm_w, norm_b, key


if __name__ == "__main__":
    # Small, ViT-consistent shapes: batch=2, tokens=8, width=32, heads=4, depth=2.
    # (Real ViT should pad N to a multiple of 8/128 at the embedding stage.)
    B, N, C = 2, 8, 32
    NUM_HEADS = 4
    DEPTH = 2

    key = jax.random.PRNGKey(0)
    block_params, norm_w, norm_b, key = init_params(key, C, DEPTH)
    key, xk = jax.random.split(key)
    x = jax.random.normal(xk, (B, N, C), jnp.float32)

    # Parameter prep happens once, at "model build" time.
    stacked = prepare_params(block_params, NUM_HEADS)

    out = vit_blocks_forward(x, stacked, norm_w, norm_b, NUM_HEADS, end_norm=True)
    out = jax.block_until_ready(out)

    ref = ref_forward(x, block_params, norm_w, norm_b, NUM_HEADS, end_norm=True)
    assert out.shape == (B, N, C)
    # Kernel uses bf16 MXU inputs (f32 accumulate), optionally bf16 exp, and an
    # approx softmax reciprocal; compare against the pure-f32 reference loosely.
    assert jnp.allclose(out, ref, atol=2e-2, rtol=2e-2), "mismatch vs reference"

    print("KERNEL_OK")
</pallas_src>

<mosaic_0001>
module attributes {stable_mosaic.version = 11 : i64} {
  func.func @kernel(%arg0: i32, %arg1: i32, %arg2: memref<1x8x32xf32, #tpu.memory_space<vmem>>, %arg3: memref<1x1x32xf32, #tpu.memory_space<vmem>>, %arg4: memref<1x1x32xf32, #tpu.memory_space<vmem>>, %arg5: memref<1x32x96xbf16, #tpu.memory_space<vmem>>, %arg6: memref<1x1x96xf32, #tpu.memory_space<vmem>>, %arg7: memref<1x32x32xbf16, #tpu.memory_space<vmem>>, %arg8: memref<1x1x32xf32, #tpu.memory_space<vmem>>, %arg9: memref<1x1x32xf32, #tpu.memory_space<vmem>>, %arg10: memref<1x1x32xf32, #tpu.memory_space<vmem>>, %arg11: memref<1x32x128xbf16, #tpu.memory_space<vmem>>, %arg12: memref<1x1x128xf32, #tpu.memory_space<vmem>>, %arg13: memref<1x128x32xbf16, #tpu.memory_space<vmem>>, %arg14: memref<1x1x32xf32, #tpu.memory_space<vmem>>, %arg15: memref<1x32xf32, #tpu.memory_space<vmem>>, %arg16: memref<1x32xf32, #tpu.memory_space<vmem>>, %arg17: memref<1x8x32xf32, #tpu.memory_space<vmem>>) attributes {dimension_semantics = [#tpu.dimension_semantics<parallel>, #tpu.dimension_semantics<arbitrary>], iteration_bounds = array<i64: 2, 2>, scalar_prefetch = 0 : i64, scratch_operands = 0 : i64, tpu.core_type = #tpu.core_type<tc>, window_params = [{transform_indices = @transform_0, window_bounds = array<i64: 1, 8, 32>}, {transform_indices = @transform_1, window_bounds = array<i64: 1, 1, 32>}, {transform_indices = @transform_2, window_bounds = array<i64: 1, 1, 32>}, {transform_indices = @transform_3, window_bounds = array<i64: 1, 32, 96>}, {transform_indices = @transform_4, window_bounds = array<i64: 1, 1, 96>}, {transform_indices = @transform_5, window_bounds = array<i64: 1, 32, 32>}, {transform_indices = @transform_6, window_bounds = array<i64: 1, 1, 32>}, {transform_indices = @transform_7, window_bounds = array<i64: 1, 1, 32>}, {transform_indices = @transform_8, window_bounds = array<i64: 1, 1, 32>}, {transform_indices = @transform_9, window_bounds = array<i64: 1, 32, 128>}, {transform_indices = @transform_10, window_bounds = array<i64: 1, 1, 128>}, {transform_indices = @transform_11, window_bounds = array<i64: 1, 128, 32>}, {transform_indices = @transform_12, window_bounds = array<i64: 1, 1, 32>}, {pipeline_mode = #tpu.pipeline_mode<synchronous>, transform_indices = @transform_13, window_bounds = array<i64: 1, 32>}, {pipeline_mode = #tpu.pipeline_mode<synchronous>, transform_indices = @transform_14, window_bounds = array<i64: 1, 32>}, {transform_indices = @transform_15, window_bounds = array<i64: 1, 8, 32>}]} {
    %c0_i32 = arith.constant 0 : i32
    %0 = arith.cmpi eq, %arg1, %c0_i32 : i32
    %1 = arith.extui %0 : i1 to i32
    %c0_i32_0 = arith.constant 0 : i32
    %2 = arith.cmpi ne, %1, %c0_i32_0 : i32
    scf.if %2 {
      %c0_62 = arith.constant 0 : index
      %c0_63 = arith.constant 0 : index
      %c0_64 = arith.constant 0 : index
      %139 = vector.load %arg2[%c0_62, %c0_63, %c0_64] : memref<1x8x32xf32, #tpu.memory_space<vmem>>, vector<1x8x32xf32>
      %c0_65 = arith.constant 0 : index
      %c0_66 = arith.constant 0 : index
      %c0_67 = arith.constant 0 : index
      %140 = vector.load %arg17[%c0_65, %c0_66, %c0_67] : memref<1x8x32xf32, #tpu.memory_space<vmem>>, vector<1x8x32xf32>
      tpu.vector_store %arg17[%c0_65, %c0_66, %c0_67], %139 {strides = array<i32>} : memref<1x8x32xf32, #tpu.memory_space<vmem>>, vector<1x8x32xf32>,
    } else {
    }
    %c0 = arith.constant 0 : index
    %c0_1 = arith.constant 0 : index
    %c0_2 = arith.constant 0 : index
    %3 = vector.load %arg17[%c0, %c0_1, %c0_2] : memref<1x8x32xf32, #tpu.memory_space<vmem>>, vector<1x8x32xf32>
    %4 = vector.shape_cast %3 : vector<1x8x32xf32> to vector<8x32xf32>
    %c0_3 = arith.constant 0 : index
    %c0_4 = arith.constant 0 : index
    %c0_5 = arith.constant 0 : index
    %5 = vector.load %arg3[%c0_3, %c0_4, %c0_5] : memref<1x1x32xf32, #tpu.memory_space<vmem>>, vector<1x1x32xf32>
    %6 = vector.shape_cast %5 : vector<1x1x32xf32> to vector<32xf32>
    %c0_6 = arith.constant 0 : index
    %c0_7 = arith.constant 0 : index
    %c0_8 = arith.constant 0 : index
    %7 = vector.load %arg4[%c0_6, %c0_7, %c0_8] : memref<1x1x32xf32, #tpu.memory_space<vmem>>, vector<1x1x32xf32>
    %8 = vector.shape_cast %7 : vector<1x1x32xf32> to vector<32xf32>
    %cst = arith.constant dense<0.000000e+00> : vector<8xf32>
    %9 = vector.multi_reduction <add>, %4, %cst [1] : vector<8x32xf32> to vector<8xf32>
    %10 = vector.shape_cast %9 : vector<8xf32> to vector<8x1xf32>
    %cst_9 = arith.constant 3.200000e+01 : f32
    %11 = vector.broadcast %cst_9 : f32 to vector<8x1xf32>
    %12 = arith.divf %10, %11 : vector<8x1xf32>
    %13 = vector.broadcast %12 : vector<8x1xf32> to vector<8x32xf32>
    %14 = arith.subf %4, %13 : vector<8x32xf32>
    %15 = arith.mulf %14, %14 : vector<8x32xf32>
    %cst_10 = arith.constant dense<0.000000e+00> : vector<8xf32>
    %16 = vector.multi_reduction <add>, %15, %cst_10 [1] : vector<8x32xf32> to vector<8xf32>
    %17 = vector.shape_cast %16 : vector<8xf32> to vector<8x1xf32>
    %cst_11 = arith.constant 3.200000e+01 : f32
    %18 = vector.broadcast %cst_11 : f32 to vector<8x1xf32>
    %19 = arith.divf %17, %18 : vector<8x1xf32>
    %20 = vector.broadcast %12 : vector<8x1xf32> to vector<8x32xf32>
    %21 = arith.subf %4, %20 : vector<8x32xf32>
    %cst_12 = arith.constant 9.99999997E-7 : f32
    %22 = vector.broadcast %cst_12 : f32 to vector<8x1xf32>
    %23 = arith.addf %19, %22 : vector<8x1xf32>
    %24 = math.rsqrt %23 : vector<8x1xf32>
    %25 = vector.broadcast %24 : vector<8x1xf32> to vector<8x32xf32>
    %26 = arith.mulf %21, %25 : vector<8x32xf32>
    %27 = vector.shape_cast %6 : vector<32xf32> to vector<1x32xf32>
    %28 = vector.broadcast %27 : vector<1x32xf32> to vector<8x32xf32>
    %29 = arith.mulf %26, %28 : vector<8x32xf32>
    %30 = vector.shape_cast %8 : vector<32xf32> to vector<1x32xf32>
    %31 = vector.broadcast %30 : vector<1x32xf32> to vector<8x32xf32>
    %32 = arith.addf %29, %31 : vector<8x32xf32>
    %33 = arith.truncf %32 : vector<8x32xf32> to vector<8x32xbf16>
    %c0_13 = arith.constant 0 : index
    %c0_14 = arith.constant 0 : index
    %c0_15 = arith.constant 0 : index
    %34 = vector.load %arg5[%c0_13, %c0_14, %c0_15] : memref<1x32x96xbf16, #tpu.memory_space<vmem>>, vector<1x32x96xbf16>
    %35 = vector.shape_cast %34 : vector<1x32x96xbf16> to vector<32x96xbf16>
    %cst_16 = arith.constant dense<0.000000e+00> : vector<8x96xf32>
    %36 = tpu.matmul %33, %35, %cst_16 {dimension_numbers = #tpu.dot_dimension_numbers<[1], [0], [0], [1], [0, 0, 1, 1], [], []>} : vector<8x32xbf16>, vector<32x96xbf16>, vector<8x96xf32> -> vector<8x96xf32>
    %c0_17 = arith.constant 0 : index
    %c0_18 = arith.constant 0 : index
    %c0_19 = arith.constant 0 : index
    %37 = vector.load %arg6[%c0_17, %c0_18, %c0_19] : memref<1x1x96xf32, #tpu.memory_space<vmem>>, vector<1x1x96xf32>
    %38 = vector.shape_cast %37 : vector<1x1x96xf32> to vector<96xf32>
    %39 = vector.shape_cast %38 : vector<96xf32> to vector<1x96xf32>
    %40 = vector.broadcast %39 : vector<1x96xf32> to vector<8x96xf32>
    %41 = arith.addf %36, %40 : vector<8x96xf32>
    %42 = arith.truncf %41 : vector<8x96xf32> to vector<8x96xbf16>
    %43 = vector.extract_strided_slice %42 {offsets = [0, 0], sizes = [8, 32], strides = [1, 1]} : vector<8x96xbf16> to vector<8x32xbf16>
    %44 = vector.shape_cast %43 : vector<8x32xbf16> to vector<8x4x8xbf16>
    %45 = tpu.transpose %44, [1, 0, 2] : vector<8x4x8xbf16> -> vector<4x8x8xbf16>
    %46 = vector.extract_strided_slice %42 {offsets = [0, 32], sizes = [8, 32], strides = [1, 1]} : vector<8x96xbf16> to vector<8x32xbf16>
    %47 = vector.shape_cast %46 : vector<8x32xbf16> to vector<8x4x8xbf16>
    %48 = tpu.transpose %47, [1, 0, 2] : vector<8x4x8xbf16> -> vector<4x8x8xbf16>
    %49 = vector.extract_strided_slice %42 {offsets = [0, 64], sizes = [8, 32], strides = [1, 1]} : vector<8x96xbf16> to vector<8x32xbf16>
    %50 = vector.shape_cast %49 : vector<8x32xbf16> to vector<8x4x8xbf16>
    %51 = tpu.transpose %50, [1, 0, 2] : vector<8x4x8xbf16> -> vector<4x8x8xbf16>
    "tpu.trace_start"() <{level = 10 : i32, message = "hqd,hkd->hqk"}> : () -> ()
    %cst_20 = arith.constant dense<0.000000e+00> : vector<4x8x8xf32>
    %52 = tpu.matmul %45, %48, %cst_20 {dimension_numbers = #tpu.dot_dimension_numbers<[2], [2], [1], [1], [0, 0, 0, 1, 1, 1], [0], [0]>} : vector<4x8x8xbf16>, vector<4x8x8xbf16>, vector<4x8x8xf32> -> vector<4x8x8xf32>
    "tpu.trace_stop"() : () -> ()
    %cst_21 = arith.constant dense<0xFF800000> : vector<4x8xf32>
    %53 = vector.multi_reduction <maximumf>, %52, %cst_21 [2] : vector<4x8x8xf32> to vector<4x8xf32>
    %54 = vector.shape_cast %53 : vector<4x8xf32> to vector<4x8x1xf32>
    %55 = vector.broadcast %54 : vector<4x8x1xf32> to vector<4x8x8xf32>
    %56 = arith.subf %52, %55 : vector<4x8x8xf32>
    %57 = arith.truncf %56 : vector<4x8x8xf32> to vector<4x8x8xbf16>
    %58 = math.exp %57 : vector<4x8x8xbf16>
    %59 = arith.extf %58 : vector<4x8x8xbf16> to vector<4x8x8xf32>
    %cst_22 = arith.constant dense<0.000000e+00> : vector<4x8xf32>
    %60 = vector.multi_reduction <add>, %59, %cst_22 [2] : vector<4x8x8xf32> to vector<4x8xf32>
    %61 = vector.shape_cast %60 : vector<4x8xf32> to vector<4x8x1xf32>
    "tpu.trace_start"() <{level = 10 : i32, message = "hqk,hkd->hqd"}> : () -> ()
    %cst_23 = arith.constant dense<0.000000e+00> : vector<4x8x8xf32>
    %62 = tpu.matmul %58, %51, %cst_23 {dimension_numbers = #tpu.dot_dimension_numbers<[2], [1], [1], [2], [0, 0, 0, 1, 1, 2], [0], [0]>} : vector<4x8x8xbf16>, vector<4x8x8xbf16>, vector<4x8x8xf32> -> vector<4x8x8xf32>
    "tpu.trace_stop"() : () -> ()
    %63 = tpu.reciprocal %61 {approx = true} : vector<4x8x1xf32> -> vector<4x8x1xf32>
    %64 = vector.broadcast %63 : vector<4x8x1xf32> to vector<4x8x8xf32>
    %65 = arith.mulf %62, %64 : vector<4x8x8xf32>
    %66 = arith.truncf %65 : vector<4x8x8xf32> to vector<4x8x8xbf16>
    %67 = tpu.transpose %66, [1, 0, 2] : vector<4x8x8xbf16> -> vector<8x4x8xbf16>
    %68 = vector.shape_cast %67 : vector<8x4x8xbf16> to vector<8x32xbf16>
    %c0_24 = arith.constant 0 : index
    %c0_25 = arith.constant 0 : index
    %c0_26 = arith.constant 0 : index
    %69 = vector.load %arg7[%c0_24, %c0_25, %c0_26] : memref<1x32x32xbf16, #tpu.memory_space<vmem>>, vector<1x32x32xbf16>
    %70 = vector.shape_cast %69 : vector<1x32x32xbf16> to vector<32x32xbf16>
    %cst_27 = arith.constant dense<0.000000e+00> : vector<8x32xf32>
    %71 = tpu.matmul %68, %70, %cst_27 {dimension_numbers = #tpu.dot_dimension_numbers<[1], [0], [0], [1], [0, 0, 1, 1], [], []>} : vector<8x32xbf16>, vector<32x32xbf16>, vector<8x32xf32> -> vector<8x32xf32>
    %c0_28 = arith.constant 0 : index
    %c0_29 = arith.constant 0 : index
    %c0_30 = arith.constant 0 : index
    %72 = vector.load %arg8[%c0_28, %c0_29, %c0_30] : memref<1x1x32xf32, #tpu.memory_space<vmem>>, vector<1x1x32xf32>
    %73 = vector.shape_cast %72 : vector<1x1x32xf32> to vector<32xf32>
    %74 = vector.shape_cast %73 : vector<32xf32> to vector<1x32xf32>
    %75 = vector.broadcast %74 : vector<1x32xf32> to vector<8x32xf32>
    %76 = arith.addf %71, %75 : vector<8x32xf32>
    %77 = arith.addf %4, %76 : vector<8x32xf32>
    %c0_31 = arith.constant 0 : index
    %c0_32 = arith.constant 0 : index
    %c0_33 = arith.constant 0 : index
    %78 = vector.load %arg9[%c0_31, %c0_32, %c0_33] : memref<1x1x32xf32, #tpu.memory_space<vmem>>, vector<1x1x32xf32>
    %79 = vector.shape_cast %78 : vector<1x1x32xf32> to vector<32xf32>
    %c0_34 = arith.constant 0 : index
    %c0_35 = arith.constant 0 : index
    %c0_36 = arith.constant 0 : index
    %80 = vector.load %arg10[%c0_34, %c0_35, %c0_36] : memref<1x1x32xf32, #tpu.memory_space<vmem>>, vector<1x1x32xf32>
    %81 = vector.shape_cast %80 : vector<1x1x32xf32> to vector<32xf32>
    %cst_37 = arith.constant dense<0.000000e+00> : vector<8xf32>
    %82 = vector.multi_reduction <add>, %77, %cst_37 [1] : vector<8x32xf32> to vector<8xf32>
    %83 = vector.shape_cast %82 : vector<8xf32> to vector<8x1xf32>
    %cst_38 = arith.constant 3.200000e+01 : f32
    %84 = vector.broadcast %cst_38 : f32 to vector<8x1xf32>
    %85 = arith.divf %83, %84 : vector<8x1xf32>
    %86 = vector.broadcast %85 : vector<8x1xf32> to vector<8x32xf32>
    %87 = arith.subf %77, %86 : vector<8x32xf32>
    %88 = arith.mulf %87, %87 : vector<8x32xf32>
    %cst_39 = arith.constant dense<0.000000e+00> : vector<8xf32>
    %89 = vector.multi_reduction <add>, %88, %cst_39 [1] : vector<8x32xf32> to vector<8xf32>
    %90 = vector.shape_cast %89 : vector<8xf32> to vector<8x1xf32>
    %cst_40 = arith.constant 3.200000e+01 : f32
    %91 = vector.broadcast %cst_40 : f32 to vector<8x1xf32>
    %92 = arith.divf %90, %91 : vector<8x1xf32>
    %93 = vector.broadcast %85 : vector<8x1xf32> to vector<8x32xf32>
    %94 = arith.subf %77, %93 : vector<8x32xf32>
    %cst_41 = arith.constant 9.99999997E-7 : f32
    %95 = vector.broadcast %cst_41 : f32 to vector<8x1xf32>
    %96 = arith.addf %92, %95 : vector<8x1xf32>
    %97 = math.rsqrt %96 : vector<8x1xf32>
    %98 = vector.broadcast %97 : vector<8x1xf32> to vector<8x32xf32>
    %99 = arith.mulf %94, %98 : vector<8x32xf32>
    %100 = vector.shape_cast %79 : vector<32xf32> to vector<1x32xf32>
    %101 = vector.broadcast %100 : vector<1x32xf32> to vector<8x32xf32>
    %102 = arith.mulf %99, %101 : vector<8x32xf32>
    %103 = vector.shape_cast %81 : vector<32xf32> to vector<1x32xf32>
    %104 = vector.broadcast %103 : vector<1x32xf32> to vector<8x32xf32>
    %105 = arith.addf %102, %104 : vector<8x32xf32>
    %106 = arith.truncf %105 : vector<8x32xf32> to vector<8x32xbf16>
    %c0_42 = arith.constant 0 : index
    %c0_43 = arith.constant 0 : index
    %c0_44 = arith.constant 0 : index
    %107 = vector.load %arg11[%c0_42, %c0_43, %c0_44] : memref<1x32x128xbf16, #tpu.memory_space<vmem>>, vector<1x32x128xbf16>
    %108 = vector.shape_cast %107 : vector<1x32x128xbf16> to vector<32x128xbf16>
    %cst_45 = arith.constant dense<0.000000e+00> : vector<8x128xf32>
    %109 = tpu.matmul %106, %108, %cst_45 {dimension_numbers = #tpu.dot_dimension_numbers<[1], [0], [0], [1], [0, 0, 1, 1], [], []>} : vector<8x32xbf16>, vector<32x128xbf16>, vector<8x128xf32> -> vector<8x128xf32>
    %c0_46 = arith.constant 0 : index
    %c0_47 = arith.constant 0 : index
    %c0_48 = arith.constant 0 : index
    %110 = vector.load %arg12[%c0_46, %c0_47, %c0_48] : memref<1x1x128xf32, #tpu.memory_space<vmem>>, vector<1x1x128xf32>
    %111 = vector.shape_cast %110 : vector<1x1x128xf32> to vector<128xf32>
    %112 = vector.shape_cast %111 : vector<128xf32> to vector<1x128xf32>
    %113 = vector.broadcast %112 : vector<1x128xf32> to vector<8x128xf32>
    %114 = arith.addf %109, %113 : vector<8x128xf32>
    %cst_49 = arith.constant 5.000000e-01 : f32
    %115 = vector.broadcast %cst_49 : f32 to vector<8x128xf32>
    %116 = arith.mulf %115, %114 : vector<8x128xf32>
    %cst_50 = arith.constant 0.707106769 : f32
    %117 = vector.broadcast %cst_50 : f32 to vector<8x128xf32>
    %118 = arith.mulf %114, %117 : vector<8x128xf32>
    %119 = math.erf %118 : vector<8x128xf32>
    %cst_51 = arith.constant 1.000000e+00 : f32
    %120 = vector.broadcast %cst_51 : f32 to vector<8x128xf32>
    %121 = arith.addf %120, %119 : vector<8x128xf32>
    %122 = arith.mulf %116, %121 : vector<8x128xf32>
    %123 = arith.truncf %122 : vector<8x128xf32> to vector<8x128xbf16>
    %c0_52 = arith.constant 0 : index
    %c0_53 = arith.constant 0 : index
    %c0_54 = arith.constant 0 : index
    %124 = vector.load %arg13[%c0_52, %c0_53, %c0_54] : memref<1x128x32xbf16, #tpu.memory_space<vmem>>, vector<1x128x32xbf16>
    %125 = vector.shape_cast %124 : vector<1x128x32xbf16> to vector<128x32xbf16>
    %cst_55 = arith.constant dense<0.000000e+00> : vector<8x32xf32>
    %126 = tpu.matmul %123, %125, %cst_55 {dimension_numbers = #tpu.dot_dimension_numbers<[1], [0], [0], [1], [0, 0, 1, 1], [], []>} : vector<8x128xbf16>, vector<128x32xbf16>, vector<8x32xf32> -> vector<8x32xf32>
    %c0_56 = arith.constant 0 : index
    %c0_57 = arith.constant 0 : index
    %c0_58 = arith.constant 0 : index
    %127 = vector.load %arg14[%c0_56, %c0_57, %c0_58] : memref<1x1x32xf32, #tpu.memory_space<vmem>>, vector<1x1x32xf32>
    %128 = vector.shape_cast %127 : vector<1x1x32xf32> to vector<32xf32>
    %129 = vector.shape_cast %128 : vector<32xf32> to vector<1x32xf32>
    %130 = vector.broadcast %129 : vector<1x32xf32> to vector<8x32xf32>
    %131 = arith.addf %126, %130 : vector<8x32xf32>
    %132 = arith.addf %77, %131 : vector<8x32xf32>
    %c1_i32 = arith.constant 1 : i32
    %133 = arith.cmpi eq, %arg1, %c1_i32 : i32
    %134 = arith.extui %133 : i1 to i32
    %c0_i32_59 = arith.constant 0 : i32
    %135 = arith.cmpi ne, %134, %c0_i32_59 : i32
    scf.if %135 {
      %c0_62 = arith.constant 0 : index
      %c0_63 = arith.constant 0 : index
      %139 = vector.load %arg15[%c0_62, %c0_63] : memref<1x32xf32, #tpu.memory_space<vmem>>, vector<1x32xf32>
      %140 = vector.shape_cast %139 : vector<1x32xf32> to vector<32xf32>
      %c0_64 = arith.constant 0 : index
      %c0_65 = arith.constant 0 : index
      %141 = vector.load %arg16[%c0_64, %c0_65] : memref<1x32xf32, #tpu.memory_space<vmem>>, vector<1x32xf32>
      %142 = vector.shape_cast %141 : vector<1x32xf32> to vector<32xf32>
      %cst_66 = arith.constant dense<0.000000e+00> : vector<8xf32>
      %143 = vector.multi_reduction <add>, %132, %cst_66 [1] : vector<8x32xf32> to vector<8xf32>
      %144 = vector.shape_cast %143 : vector<8xf32> to vector<8x1xf32>
      %cst_67 = arith.constant 3.200000e+01 : f32
      %145 = vector.broadcast %cst_67 : f32 to vector<8x1xf32>
      %146 = arith.divf %144, %145 : vector<8x1xf32>
      %147 = vector.broadcast %146 : vector<8x1xf32> to vector<8x32xf32>
      %148 = arith.subf %132, %147 : vector<8x32xf32>
      %149 = arith.mulf %148, %148 : vector<8x32xf32>
      %cst_68 = arith.constant dense<0.000000e+00> : vector<8xf32>
      %150 = vector.multi_reduction <add>, %149, %cst_68 [1] : vector<8x32xf32> to vector<8xf32>
      %151 = vector.shape_cast %150 : vector<8xf32> to vector<8x1xf32>
      %cst_69 = arith.constant 3.200000e+01 : f32
      %152 = vector.broadcast %cst_69 : f32 to vector<8x1xf32>
      %153 = arith.divf %151, %152 : vector<8x1xf32>
      %154 = vector.broadcast %146 : vector<8x1xf32> to vector<8x32xf32>
      %155 = arith.subf %132, %154 : vector<8x32xf32>
      %cst_70 = arith.constant 9.99999997E-7 : f32
      %156 = vector.broadcast %cst_70 : f32 to vector<8x1xf32>
      %157 = arith.addf %153, %156 : vector<8x1xf32>
      %158 = math.rsqrt %157 : vector<8x1xf32>
      %159 = vector.broadcast %158 : vector<8x1xf32> to vector<8x32xf32>
      %160 = arith.mulf %155, %159 : vector<8x32xf32>
      %161 = vector.shape_cast %140 : vector<32xf32> to vector<1x32xf32>
      %162 = vector.broadcast %161 : vector<1x32xf32> to vector<8x32xf32>
      %163 = arith.mulf %160, %162 : vector<8x32xf32>
      %164 = vector.shape_cast %142 : vector<32xf32> to vector<1x32xf32>
      %165 = vector.broadcast %164 : vector<1x32xf32> to vector<8x32xf32>
      %166 = arith.addf %163, %165 : vector<8x32xf32>
      %c0_71 = arith.constant 0 : index
      %c0_72 = arith.constant 0 : index
      %c0_73 = arith.constant 0 : index
      %167 = vector.load %arg17[%c0_71, %c0_72, %c0_73] : memref<1x8x32xf32, #tpu.memory_space<vmem>>, vector<1x8x32xf32>
      %168 = vector.shape_cast %167 : vector<1x8x32xf32> to vector<8x32xf32>
      %169 = vector.shape_cast %166 : vector<8x32xf32> to vector<1x8x32xf32>
      tpu.vector_store %arg17[%c0_71, %c0_72, %c0_73], %169 {strides = array<i32>} : memref<1x8x32xf32, #tpu.memory_space<vmem>>, vector<1x8x32xf32>,
    } else {
    }
    %c1_i32_60 = arith.constant 1 : i32
    %136 = arith.cmpi ne, %arg1, %c1_i32_60 : i32
    %137 = arith.extui %136 : i1 to i32
    %c0_i32_61 = arith.constant 0 : i32
    %138 = arith.cmpi ne, %137, %c0_i32_61 : i32
    scf.if %138 {
      %c0_62 = arith.constant 0 : index
      %c0_63 = arith.constant 0 : index
      %c0_64 = arith.constant 0 : index
      %139 = vector.load %arg17[%c0_62, %c0_63, %c0_64] : memref<1x8x32xf32, #tpu.memory_space<vmem>>, vector<1x8x32xf32>
      %140 = vector.shape_cast %139 : vector<1x8x32xf32> to vector<8x32xf32>
      %141 = vector.shape_cast %132 : vector<8x32xf32> to vector<1x8x32xf32>
      tpu.vector_store %arg17[%c0_62, %c0_63, %c0_64], %141 {strides = array<i32>} : memref<1x8x32xf32, #tpu.memory_space<vmem>>, vector<1x8x32xf32>,
    } else {
    }
    return
  }
  func.func @transform_0(%arg0: i32, %arg1: i32) -> (i32, i32, i32) {
    %c0_i32 = arith.constant 0 : i32
    %c0_i32_0 = arith.constant 0 : i32
    %c0_i32_1 = arith.constant 0 : i32
    return %arg0, %c0_i32, %c0_i32_0 : i32, i32, i32
  }
  func.func @transform_1(%arg0: i32, %arg1: i32) -> (i32, i32, i32) {
    %c0_i32 = arith.constant 0 : i32
    %c0_i32_0 = arith.constant 0 : i32
    %c0_i32_1 = arith.constant 0 : i32
    return %arg1, %c0_i32, %c0_i32_0 : i32, i32, i32
  }
  func.func @transform_2(%arg0: i32, %arg1: i32) -> (i32, i32, i32) {
    %c0_i32 = arith.constant 0 : i32
    %c0_i32_0 = arith.constant 0 : i32
    %c0_i32_1 = arith.constant 0 : i32
    return %arg1, %c0_i32, %c0_i32_0 : i32, i32, i32
  }
  func.func @transform_3(%arg0: i32, %arg1: i32) -> (i32, i32, i32) {
    %c0_i32 = arith.constant 0 : i32
    %c0_i32_0 = arith.constant 0 : i32
    %c0_i32_1 = arith.constant 0 : i32
    return %arg1, %c0_i32, %c0_i32_0 : i32, i32, i32
  }
  func.func @transform_4(%arg0: i32, %arg1: i32) -> (i32, i32, i32) {
    %c0_i32 = arith.constant 0 : i32
    %c0_i32_0 = arith.constant 0 : i32
    %c0_i32_1 = arith.constant 0 : i32
    return %arg1, %c0_i32, %c0_i32_0 : i32, i32, i32
  }
  func.func @transform_5(%arg0: i32, %arg1: i32) -> (i32, i32, i32) {
    %c0_i32 = arith.constant 0 : i32
    %c0_i32_0 = arith.constant 0 : i32
    %c0_i32_1 = arith.constant 0 : i32
    return %arg1, %c0_i32, %c0_i32_0 : i32, i32, i32
  }
  func.func @transform_6(%arg0: i32, %arg1: i32) -> (i32, i32, i32) {
    %c0_i32 = arith.constant 0 : i32
    %c0_i32_0 = arith.constant 0 : i32
    %c0_i32_1 = arith.constant 0 : i32
    return %arg1, %c0_i32, %c0_i32_0 : i32, i32, i32
  }
  func.func @transform_7(%arg0: i32, %arg1: i32) -> (i32, i32, i32) {
    %c0_i32 = arith.constant 0 : i32
    %c0_i32_0 = arith.constant 0 : i32
    %c0_i32_1 = arith.constant 0 : i32
    return %arg1, %c0_i32, %c0_i32_0 : i32, i32, i32
  }
  func.func @transform_8(%arg0: i32, %arg1: i32) -> (i32, i32, i32) {
    %c0_i32 = arith.constant 0 : i32
    %c0_i32_0 = arith.constant 0 : i32
    %c0_i32_1 = arith.constant 0 : i32
    return %arg1, %c0_i32, %c0_i32_0 : i32, i32, i32
  }
  func.func @transform_9(%arg0: i32, %arg1: i32) -> (i32, i32, i32) {
    %c0_i32 = arith.constant 0 : i32
    %c0_i32_0 = arith.constant 0 : i32
    %c0_i32_1 = arith.constant 0 : i32
    return %arg1, %c0_i32, %c0_i32_0 : i32, i32, i32
  }
  func.func @transform_10(%arg0: i32, %arg1: i32) -> (i32, i32, i32) {
    %c0_i32 = arith.constant 0 : i32
    %c0_i32_0 = arith.constant 0 : i32
    %c0_i32_1 = arith.constant 0 : i32
    return %arg1, %c0_i32, %c0_i32_0 : i32, i32, i32
  }
  func.func @transform_11(%arg0: i32, %arg1: i32) -> (i32, i32, i32) {
    %c0_i32 = arith.constant 0 : i32
    %c0_i32_0 = arith.constant 0 : i32
    %c0_i32_1 = arith.constant 0 : i32
    return %arg1, %c0_i32, %c0_i32_0 : i32, i32, i32
  }
  func.func @transform_12(%arg0: i32, %arg1: i32) -> (i32, i32, i32) {
    %c0_i32 = arith.constant 0 : i32
    %c0_i32_0 = arith.constant 0 : i32
    %c0_i32_1 = arith.constant 0 : i32
    return %arg1, %c0_i32, %c0_i32_0 : i32, i32, i32
  }
  func.func @transform_13(%arg0: i32, %arg1: i32) -> (i32, i32) {
    %c0_i32 = arith.constant 0 : i32
    %c0_i32_0 = arith.constant 0 : i32
    %c0_i32_1 = arith.constant 0 : i32
    return %c0_i32, %c0_i32_0 : i32, i32
  }
  func.func @transform_14(%arg0: i32, %arg1: i32) -> (i32, i32) {
    %c0_i32 = arith.constant 0 : i32
    %c0_i32_0 = arith.constant 0 : i32
    %c0_i32_1 = arith.constant 0 : i32
    return %c0_i32, %c0_i32_0 : i32, i32
  }
  func.func @transform_15(%arg0: i32, %arg1: i32) -> (i32, i32, i32) {
    %c0_i32 = arith.constant 0 : i32
    %c0_i32_0 = arith.constant 0 : i32
    %c0_i32_1 = arith.constant 0 : i32
    return %arg0, %c0_i32, %c0_i32_0 : i32, i32, i32
  }
}

</mosaic_0001>

<llo_original>
// kernel: tpu_custom_call.1
$region0: #{tpu_custom_call.1}
  #allocation0 [shape = 'u32[]', space=smem, size = 0x4, offset = 0x4, fixed_abs, tag = 'smem constant byte address 0x4 - core index']
  #allocation1 [shape = 'u32[144,128]{1,0:T(1,128)}', space=vmem, size = 0x12000, scoped, tag = 'internal scratch']
  %s0 = inlined_call_operand.vmem [shape: f32[2,8,32], index: 0, kind: input, shape index: {}]
  %s1 = inlined_call_operand.vmem [shape: f32[2,1,32], index: 1, kind: input, shape index: {}]
  %s2 = inlined_call_operand.vmem [shape: f32[2,1,32], index: 2, kind: input, shape index: {}]
  %s3 = inlined_call_operand.vmem [shape: bf16[2,32,96], index: 3, kind: input, shape index: {}]
  %s4 = inlined_call_operand.vmem [shape: f32[2,1,96], index: 4, kind: input, shape index: {}]
  %s5 = inlined_call_operand.vmem [shape: bf16[2,32,32], index: 5, kind: input, shape index: {}]
  %s6 = inlined_call_operand.vmem [shape: f32[2,1,32], index: 6, kind: input, shape index: {}]
  %s7 = inlined_call_operand.vmem [shape: f32[2,1,32], index: 7, kind: input, shape index: {}]
  %s8 = inlined_call_operand.vmem [shape: f32[2,1,32], index: 8, kind: input, shape index: {}]
  %s9 = inlined_call_operand.vmem [shape: bf16[2,32,128], index: 9, kind: input, shape index: {}]
  %s10 = inlined_call_operand.vmem [shape: f32[2,1,128], index: 10, kind: input, shape index: {}]
  %s11 = inlined_call_operand.vmem [shape: bf16[2,128,32], index: 11, kind: input, shape index: {}]
  %s12 = inlined_call_operand.vmem [shape: f32[2,1,32], index: 12, kind: input, shape index: {}]
  %s13 = inlined_call_operand.vmem [shape: f32[1,32], index: 13, kind: input, shape index: {}]
  %s14 = inlined_call_operand.vmem [shape: f32[1,32], index: 14, kind: input, shape index: {}]
  %s15 = inlined_call_operand.hbm [shape: f32[2,8,32], index: 15, kind: output, shape index: {}]
  %s16 = sld [smem:[#allocation0]]
  $region105: #{tpu_custom_call.1} parent=0
    _
  %s18 = ssub.s32 1, %s16
  %s19 = scalar_select 0, %s18, %s16
  $region1: #{tpu_custom_call.1} parent=0
    #allocation2 [shape = 'u8[8192]{0}', space=vmem, size = 0x2000, scoped, tag = 'output window, operand 0']
    #allocation3 [shape = 's32[2]{0}', space=sflag, size = 0x8, scoped, tag = 'scoped memory for tpu_custom_call.1']
    %20 = vsyncpa [#allocation3], 0
    %s21 = scalar_lea.sflag [#allocation3], 1
    %22 = vsyncpa %s21, 0
    loop: start=0, step=1, limit=6
    $region2: #{tpu_custom_call.1} parent=1 // loop_pre_header
      _
    $region3: #{tpu_custom_call.1} parent=1 // loop_header
      %s24 = sphi 0, %s28
      %p25 = scmp.ge.s32.totalorder %s24, 6
      %s31 = sphi 0, %s43
      %s32 = sphi 0, %s39
      %s33 = sphi 0, %s31
      %s34 = sphi 0, %s32
      %s35 = sphi 0, %s33
      %s36 = sphi 0, %s34
      %s46 = sphi 0, %s48
      %s49 = sphi 0, %s46
      %s50 = sphi 0, %s49
      %s66 = sphi 0, %s50
      %s72 = sphi 0, %s74
      %s75 = sphi 0, %s72
      %s76 = sphi 0, %s75
      %s92 = sphi 0, %s76
      %s98 = sphi 0, %s100
      %s101 = sphi 0, %s98
      %s102 = sphi 0, %s101
      %s118 = sphi 0, %s102
      %s124 = sphi 0, %s126
      %s127 = sphi 0, %s124
      %s128 = sphi 0, %s127
      %s144 = sphi 0, %s128
      %s150 = sphi 0, %s152
      %s153 = sphi 0, %s150
      %s154 = sphi 0, %s153
      %s170 = sphi 0, %s154
      %s176 = sphi 0, %s178
      %s179 = sphi 0, %s176
      %s180 = sphi 0, %s179
      %s196 = sphi 0, %s180
      %s202 = sphi 0, %s204
      %s205 = sphi 0, %s202
      %s206 = sphi 0, %s205
      %s222 = sphi 0, %s206
      %s228 = sphi 0, %s230
      %s231 = sphi 0, %s228
      %s232 = sphi 0, %s231
      %s248 = sphi 0, %s232
      %s254 = sphi 0, %s256
      %s257 = sphi 0, %s254
      %s258 = sphi 0, %s257
      %s274 = sphi 0, %s258
      %s280 = sphi 0, %s282
      %s283 = sphi 0, %s280
      %s284 = sphi 0, %s283
      %s300 = sphi 0, %s284
      %s306 = sphi 0, %s308
      %s309 = sphi 0, %s306
      %s310 = sphi 0, %s309
      %s326 = sphi 0, %s310
      %s332 = sphi 0, %s334
      %s335 = sphi 0, %s332
      %s336 = sphi 0, %s335
      %s352 = sphi 0, %s336
      %s358 = sphi 0, %s360
      %s361 = sphi 0, %s358
      %s362 = sphi 0, %s361
      %s378 = sphi 0, %s362
      %s382 = sphi 0, %s382
      %s384 = sphi 0, %s382
      %s385 = sphi 0, %s384
      %s399 = sphi 0, %s385
      %s403 = sphi 0, %s403
      %s405 = sphi 0, %s403
      %s406 = sphi 0, %s405
      %s420 = sphi 0, %s406
      %s426 = sphi 0, %s428
      %s429 = sphi 0, %s426
      %s430 = sphi 0, %s429
      %s446 = sphi 0, %s430
    $region4: #{tpu_custom_call.1} parent=1 // loop_header_branch
      %27 = sbr.rel (%p25) target = $region8
    $region5: #{tpu_custom_call.1} parent=1 // loop_body
      %s29 = ssub.s32 %s24, 1
      %s30 = ssub.s32 %s24, 2
      %s37 = sadd.s32 1, %s32
      %p38 = scmp.ge.s32.totalorder %s37, 2
      %s39 = scalar_select %p38, 0, %s37
      %s40 = sadd.s32 1, %s31
      %s41 = scalar_select %p38, %s40, %s31
      %p42 = scmp.ge.s32.totalorder %s41, 2
      %s43 = scalar_select %p42, 0, %s41
      %s44 = ssub.s32 %s31, %s43
      %p45 = scmp.eq.s32.totalorder %s44, 0
      %s47 = sadd.s32 %s46, 1
      %s48 = scalar_select %p45, %s46, %s47
      %p51 = pneg %p45
      %p52 = scmp.eq.s32.totalorder %s24, 3
      %p53 = por %p51, %p52
      %p54 = scmp.ne.s32.totalorder %s46, %s49
      %p55 = scmp.eq.s32.totalorder %s24, 0
      %p56 = por %p54, %p55
      %p57 = scmp.ne.s32.totalorder %s46, %s49
      %p58 = scmp.eq.s32.totalorder %s29, 3
      %p59 = por %p57, %p58
      %p60 = scmp.ne.s32.totalorder %s49, %s50
      %p61 = scmp.eq.s32.totalorder %s29, 0
      %p62 = por %p60, %p61
      %p63 = scmp.ne.s32.totalorder %s49, %s50
      %p64 = scmp.eq.s32.totalorder %s30, 3
      %p65 = por %p63, %p64
      %p67 = scmp.ne.s32.totalorder %s50, %s66
      %p68 = scmp.eq.s32.totalorder %s30, 0
      %p69 = por %p67, %p68
      %s70 = ssub.s32 %s32, %s39
      %p71 = scmp.eq.s32.totalorder %s70, 0
      %s73 = sadd.s32 %s72, 1
      %s74 = scalar_select %p71, %s72, %s73
      %p77 = pneg %p71
      %p78 = scmp.eq.s32.totalorder %s24, 3
      %p79 = por %p77, %p78
      %p80 = scmp.ne.s32.totalorder %s72, %s75
      %p81 = scmp.eq.s32.totalorder %s24, 0
      %p82 = por %p80, %p81
      %p83 = scmp.ne.s32.totalorder %s72, %s75
      %p84 = scmp.eq.s32.totalorder %s29, 3
      %p85 = por %p83, %p84
      %p86 = scmp.ne.s32.totalorder %s75, %s76
      %p87 = scmp.eq.s32.totalorder %s29, 0
      %p88 = por %p86, %p87
      %p89 = scmp.ne.s32.totalorder %s75, %s76
      %p90 = scmp.eq.s32.totalorder %s30, 3
      %p91 = por %p89, %p90
      %p93 = scmp.ne.s32.totalorder %s76, %s92
      %p94 = scmp.eq.s32.totalorder %s30, 0
      %p95 = por %p93, %p94
      %s96 = ssub.s32 %s32, %s39
      %p97 = scmp.eq.s32.totalorder %s96, 0
      %s99 = sadd.s32 %s98, 1
      %s100 = scalar_select %p97, %s98, %s99
      %p103 = pneg %p97
      %p104 = scmp.eq.s32.totalorder %s24, 3
      %p105 = por %p103, %p104
      %p106 = scmp.ne.s32.totalorder %s98, %s101
      %p107 = scmp.eq.s32.totalorder %s24, 0
      %p108 = por %p106, %p107
      %p109 = scmp.ne.s32.totalorder %s98, %s101
      %p110 = scmp.eq.s32.totalorder %s29, 3
      %p111 = por %p109, %p110
      %p112 = scmp.ne.s32.totalorder %s101, %s102
      %p113 = scmp.eq.s32.totalorder %s29, 0
      %p114 = por %p112, %p113
      %p115 = scmp.ne.s32.totalorder %s101, %s102
      %p116 = scmp.eq.s32.totalorder %s30, 3
      %p117 = por %p115, %p116
      %p119 = scmp.ne.s32.totalorder %s102, %s118
      %p120 = scmp.eq.s32.totalorder %s30, 0
      %p121 = por %p119, %p120
      %s122 = ssub.s32 %s32, %s39
      %p123 = scmp.eq.s32.totalorder %s122, 0
      %s125 = sadd.s32 %s124, 1
      %s126 = scalar_select %p123, %s124, %s125
      %p129 = pneg %p123
      %p130 = scmp.eq.s32.totalorder %s24, 3
      %p131 = por %p129, %p130
      %p132 = scmp.ne.s32.totalorder %s124, %s127
      %p133 = scmp.eq.s32.totalorder %s24, 0
      %p134 = por %p132, %p133
      %p135 = scmp.ne.s32.totalorder %s124, %s127
      %p136 = scmp.eq.s32.totalorder %s29, 3
      %p137 = por %p135, %p136
      %p138 = scmp.ne.s32.totalorder %s127, %s128
      %p139 = scmp.eq.s32.totalorder %s29, 0
      %p140 = por %p138, %p139
      %p141 = scmp.ne.s32.totalorder %s127, %s128
      %p142 = scmp.eq.s32.totalorder %s30, 3
      %p143 = por %p141, %p142
      %p145 = scmp.ne.s32.totalorder %s128, %s144
      %p146 = scmp.eq.s32.totalorder %s30, 0
      %p147 = por %p145, %p146
      %s148 = ssub.s32 %s32, %s39
      %p149 = scmp.eq.s32.totalorder %s148, 0
      %s151 = sadd.s32 %s150, 1
      %s152 = scalar_select %p149, %s150, %s151
      %p155 = pneg %p149
      %p156 = scmp.eq.s32.totalorder %s24, 3
      %p157 = por %p155, %p156
      %p158 = scmp.ne.s32.totalorder %s150, %s153
      %p159 = scmp.eq.s32.totalorder %s24, 0
      %p160 = por %p158, %p159
      %p161 = scmp.ne.s32.totalorder %s150, %s153
      %p162 = scmp.eq.s32.totalorder %s29, 3
      %p163 = por %p161, %p162
      %p164 = scmp.ne.s32.totalorder %s153, %s154
      %p165 = scmp.eq.s32.totalorder %s29, 0
      %p166 = por %p164, %p165
      %p167 = scmp.ne.s32.totalorder %s153, %s154
      %p168 = scmp.eq.s32.totalorder %s30, 3
      %p169 = por %p167, %p168
      %p171 = scmp.ne.s32.totalorder %s154, %s170
      %p172 = scmp.eq.s32.totalorder %s30, 0
      %p173 = por %p171, %p172
      %s174 = ssub.s32 %s32, %s39
      %p175 = scmp.eq.s32.totalorder %s174, 0
      %s177 = sadd.s32 %s176, 1
      %s178 = scalar_select %p175, %s176, %s177
      %p181 = pneg %p175
      %p182 = scmp.eq.s32.totalorder %s24, 3
      %p183 = por %p181, %p182
      %p184 = scmp.ne.s32.totalorder %s176, %s179
      %p185 = scmp.eq.s32.totalorder %s24, 0
      %p186 = por %p184, %p185
      %p187 = scmp.ne.s32.totalorder %s176, %s179
      %p188 = scmp.eq.s32.totalorder %s29, 3
      %p189 = por %p187, %p188
      %p190 = scmp.ne.s32.totalorder %s179, %s180
      %p191 = scmp.eq.s32.totalorder %s29, 0
      %p192 = por %p190, %p191
      %p193 = scmp.ne.s32.totalorder %s179, %s180
      %p194 = scmp.eq.s32.totalorder %s30, 3
      %p195 = por %p193, %p194
      %p197 = scmp.ne.s32.totalorder %s180, %s196
      %p198 = scmp.eq.s32.totalorder %s30, 0
      %p199 = por %p197, %p198
      %s200 = ssub.s32 %s32, %s39
      %p201 = scmp.eq.s32.totalorder %s200, 0
      %s203 = sadd.s32 %s202, 1
      %s204 = scalar_select %p201, %s202, %s203
      %p207 = pneg %p201
      %p208 = scmp.eq.s32.totalorder %s24, 3
      %p209 = por %p207, %p208
      %p210 = scmp.ne.s32.totalorder %s202, %s205
      %p211 = scmp.eq.s32.totalorder %s24, 0
      %p212 = por %p210, %p211
      %p213 = scmp.ne.s32.totalorder %s202, %s205
      %p214 = scmp.eq.s32.totalorder %s29, 3
      %p215 = por %p213, %p214
      %p216 = scmp.ne.s32.totalorder %s205, %s206
      %p217 = scmp.eq.s32.totalorder %s29, 0
      %p218 = por %p216, %p217
      %p219 = scmp.ne.s32.totalorder %s205, %s206
      %p220 = scmp.eq.s32.totalorder %s30, 3
      %p221 = por %p219, %p220
      %p223 = scmp.ne.s32.totalorder %s206, %s222
      %p224 = scmp.eq.s32.totalorder %s30, 0
      %p225 = por %p223, %p224
      %s226 = ssub.s32 %s32, %s39
      %p227 = scmp.eq.s32.totalorder %s226, 0
      %s229 = sadd.s32 %s228, 1
      %s230 = scalar_select %p227, %s228, %s229
      %p233 = pneg %p227
      %p234 = scmp.eq.s32.totalorder %s24, 3
      %p235 = por %p233, %p234
      %p236 = scmp.ne.s32.totalorder %s228, %s231
      %p237 = scmp.eq.s32.totalorder %s24, 0
      %p238 = por %p236, %p237
      %p239 = scmp.ne.s32.totalorder %s228, %s231
      %p240 = scmp.eq.s32.totalorder %s29, 3
      %p241 = por %p239, %p240
      %p242 = scmp.ne.s32.totalorder %s231, %s232
      %p243 = scmp.eq.s32.totalorder %s29, 0
      %p244 = por %p242, %p243
      %p245 = scmp.ne.s32.totalorder %s231, %s232
      %p246 = scmp.eq.s32.totalorder %s30, 3
      %p247 = por %p245, %p246
      %p249 = scmp.ne.s32.totalorder %s232, %s248
      %p250 = scmp.eq.s32.totalorder %s30, 0
      %p251 = por %p249, %p250
      %s252 = ssub.s32 %s32, %s39
      %p253 = scmp.eq.s32.totalorder %s252, 0
      %s255 = sadd.s32 %s254, 1
      %s256 = scalar_select %p253, %s254, %s255
      %p259 = pneg %p253
      %p260 = scmp.eq.s32.totalorder %s24, 3
      %p261 = por %p259, %p260
      %p262 = scmp.ne.s32.totalorder %s254, %s257
      %p263 = scmp.eq.s32.totalorder %s24, 0
      %p264 = por %p262, %p263
      %p265 = scmp.ne.s32.totalorder %s254, %s257
      %p266 = scmp.eq.s32.totalorder %s29, 3
      %p267 = por %p265, %p266
      %p268 = scmp.ne.s32.totalorder %s257, %s258
      %p269 = scmp.eq.s32.totalorder %s29, 0
      %p270 = por %p268, %p269
      %p271 = scmp.ne.s32.totalorder %s257, %s258
      %p272 = scmp.eq.s32.totalorder %s30, 3
      %p273 = por %p271, %p272
      %p275 = scmp.ne.s32.totalorder %s258, %s274
      %p276 = scmp.eq.s32.totalorder %s30, 0
      %p277 = por %p275, %p276
      %s278 = ssub.s32 %s32, %s39
      %p279 = scmp.eq.s32.totalorder %s278, 0
      %s281 = sadd.s32 %s280, 1
      %s282 = scalar_select %p279, %s280, %s281
      %p285 = pneg %p279
      %p286 = scmp.eq.s32.totalorder %s24, 3
      %p287 = por %p285, %p286
      %p288 = scmp.ne.s32.totalorder %s280, %s283
      %p289 = scmp.eq.s32.totalorder %s24, 0
      %p290 = por %p288, %p289
      %p291 = scmp.ne.s32.totalorder %s280, %s283
      %p292 = scmp.eq.s32.totalorder %s29, 3
      %p293 = por %p291, %p292
      %p294 = scmp.ne.s32.totalorder %s283, %s284
      %p295 = scmp.eq.s32.totalorder %s29, 0
      %p296 = por %p294, %p295
      %p297 = scmp.ne.s32.totalorder %s283, %s284
      %p298 = scmp.eq.s32.totalorder %s30, 3
      %p299 = por %p297, %p298
      %p301 = scmp.ne.s32.totalorder %s284, %s300
      %p302 = scmp.eq.s32.totalorder %s30, 0
      %p303 = por %p301, %p302
      %s304 = ssub.s32 %s32, %s39
      %p305 = scmp.eq.s32.totalorder %s304, 0
      %s307 = sadd.s32 %s306, 1
      %s308 = scalar_select %p305, %s306, %s307
      %p311 = pneg %p305
      %p312 = scmp.eq.s32.totalorder %s24, 3
      %p313 = por %p311, %p312
      %p314 = scmp.ne.s32.totalorder %s306, %s309
      %p315 = scmp.eq.s32.totalorder %s24, 0
      %p316 = por %p314, %p315
      %p317 = scmp.ne.s32.totalorder %s306, %s309
      %p318 = scmp.eq.s32.totalorder %s29, 3
      %p319 = por %p317, %p318
      %p320 = scmp.ne.s32.totalorder %s309, %s310
      %p321 = scmp.eq.s32.totalorder %s29, 0
      %p322 = por %p320, %p321
      %p323 = scmp.ne.s32.totalorder %s309, %s310
      %p324 = scmp.eq.s32.totalorder %s30, 3
      %p325 = por %p323, %p324
      %p327 = scmp.ne.s32.totalorder %s310, %s326
      %p328 = scmp.eq.s32.totalorder %s30, 0
      %p329 = por %p327, %p328
      %s330 = ssub.s32 %s32, %s39
      %p331 = scmp.eq.s32.totalorder %s330, 0
      %s333 = sadd.s32 %s332, 1
      %s334 = scalar_select %p331, %s332, %s333
      %p337 = pneg %p331
      %p338 = scmp.eq.s32.totalorder %s24, 3
      %p339 = por %p337, %p338
      %p340 = scmp.ne.s32.totalorder %s332, %s335
      %p341 = scmp.eq.s32.totalorder %s24, 0
      %p342 = por %p340, %p341
      %p343 = scmp.ne.s32.totalorder %s332, %s335
      %p344 = scmp.eq.s32.totalorder %s29, 3
      %p345 = por %p343, %p344
      %p346 = scmp.ne.s32.totalorder %s335, %s336
      %p347 = scmp.eq.s32.totalorder %s29, 0
      %p348 = por %p346, %p347
      %p349 = scmp.ne.s32.totalorder %s335, %s336
      %p350 = scmp.eq.s32.totalorder %s30, 3
      %p351 = por %p349, %p350
      %p353 = scmp.ne.s32.totalorder %s336, %s352
      %p354 = scmp.eq.s32.totalorder %s30, 0
      %p355 = por %p353, %p354
      %s356 = ssub.s32 %s32, %s39
      %p357 = scmp.eq.s32.totalorder %s356, 0
      %s359 = sadd.s32 %s358, 1
      %s360 = scalar_select %p357, %s358, %s359
      %p363 = pneg %p357
      %p364 = scmp.eq.s32.totalorder %s24, 3
      %p365 = por %p363, %p364
      %p366 = scmp.ne.s32.totalorder %s358, %s361
      %p367 = scmp.eq.s32.totalorder %s24, 0
      %p368 = por %p366, %p367
      %p369 = scmp.ne.s32.totalorder %s358, %s361
      %p370 = scmp.eq.s32.totalorder %s29, 3
      %p371 = por %p369, %p370
      %p372 = scmp.ne.s32.totalorder %s361, %s362
      %p373 = scmp.eq.s32.totalorder %s29, 0
      %p374 = por %p372, %p373
      %p375 = scmp.ne.s32.totalorder %s361, %s362
      %p376 = scmp.eq.s32.totalorder %s30, 3
      %p377 = por %p375, %p376
      %p379 = scmp.ne.s32.totalorder %s362, %s378
      %p380 = scmp.eq.s32.totalorder %s30, 0
      %p381 = por %p379, %p380
      %s383 = sadd.s32 %s382, 1
      %p386 = scmp.eq.s32.totalorder %s24, 3
      %p387 = scmp.ne.s32.totalorder %s382, %s384
      %p388 = scmp.eq.s32.totalorder %s24, 0
      %p389 = por %p387, %p388
      %p390 = scmp.ne.s32.totalorder %s382, %s384
      %p391 = scmp.eq.s32.totalorder %s29, 3
      %p392 = por %p390, %p391
      %p393 = scmp.ne.s32.totalorder %s384, %s385
      %p394 = scmp.eq.s32.totalorder %s29, 0
      %p395 = por %p393, %p394
      %p396 = scmp.ne.s32.totalorder %s384, %s385
      %p397 = scmp.eq.s32.totalorder %s30, 3
      %p398 = por %p396, %p397
      %p400 = scmp.ne.s32.totalorder %s385, %s399
      %p401 = scmp.eq.s32.totalorder %s30, 0
      %p402 = por %p400, %p401
      %s404 = sadd.s32 %s403, 1
      %p407 = scmp.eq.s32.totalorder %s24, 3
      %p408 = scmp.ne.s32.totalorder %s403, %s405
      %p409 = scmp.eq.s32.totalorder %s24, 0
      %p410 = por %p408, %p409
      %p411 = scmp.ne.s32.totalorder %s403, %s405
      %p412 = scmp.eq.s32.totalorder %s29, 3
      %p413 = por %p411, %p412
      %p414 = scmp.ne.s32.totalorder %s405, %s406
      %p415 = scmp.eq.s32.totalorder %s29, 0
      %p416 = por %p414, %p415
      %p417 = scmp.ne.s32.totalorder %s405, %s406
      %p418 = scmp.eq.s32.totalorder %s30, 3
      %p419 = por %p417, %p418
      %p421 = scmp.ne.s32.totalorder %s406, %s420
      %p422 = scmp.eq.s32.totalorder %s30, 0
      %p423 = por %p421, %p422
      %s424 = ssub.s32 %s31, %s43
      %p425 = scmp.eq.s32.totalorder %s424, 0
      %s427 = sadd.s32 %s426, 1
      %s428 = scalar_select %p425, %s426, %s427
      %p431 = pneg %p425
      %p432 = scmp.eq.s32.totalorder %s24, 3
      %p433 = por %p431, %p432
      %p434 = scmp.ne.s32.totalorder %s426, %s429
      %p435 = scmp.eq.s32.totalorder %s24, 0
      %p436 = por %p434, %p435
      %p437 = scmp.ne.s32.totalorder %s426, %s429
      %p438 = scmp.eq.s32.totalorder %s29, 3
      %p439 = por %p437, %p438
      %p440 = scmp.ne.s32.totalorder %s429, %s430
      %p441 = scmp.eq.s32.totalorder %s29, 0
      %p442 = por %p440, %p441
      %p443 = scmp.ne.s32.totalorder %s429, %s430
      %p444 = scmp.eq.s32.totalorder %s30, 3
      %p445 = por %p443, %p444
      %p447 = scmp.ne.s32.totalorder %s430, %s446
      %p448 = scmp.eq.s32.totalorder %s30, 0
      %p449 = por %p447, %p448
      %p450 = scmp.le.s32.totalorder 1, %s24
      %p451 = scmp.lt.s32.totalorder %s24, 5
      %p452 = pnand %p450, %p451
      %p453 = pneg %p452
      // Predicated region
      $region9: #{tpu_custom_call.1} parent=5 // pred_check
        _
      $region10: #{tpu_custom_call.1} parent=5 // pred_check_branch
        %455 = sbr.rel (%p452) target = $region12
      $region11: #{tpu_custom_call.1} parent=5 // pred_region
        %s456 = ssub.s32 %s24, 1
        // Predicated region
        $region13: #{tpu_custom_call.1} parent=11 // pred_check
          %p457 = pneg %p395
        $region14: #{tpu_custom_call.1} parent=11 // pred_check_branch
          %459 = sbr.rel (%p457) target = $region16
        $region15: #{tpu_custom_call.1} parent=11 // pred_region
          _
        $region16: #{tpu_custom_call.1} parent=11 // pred_fallthru
          _
        // Predicated region
        $region17: #{tpu_custom_call.1} parent=11 // pred_check
          %p460 = pneg %p416
        $region18: #{tpu_custom_call.1} parent=11 // pred_check_branch
          %462 = sbr.rel (%p460) target = $region20
        $region19: #{tpu_custom_call.1} parent=11 // pred_region
          _
        $region20: #{tpu_custom_call.1} parent=11 // pred_fallthru
          _
      $region12: #{tpu_custom_call.1} parent=5 // pred_fallthru
        _
      %p463 = scmp.lt.s32.totalorder %s24, 4
      // Predicated region
      $region21: #{tpu_custom_call.1} parent=5 // pred_check
        %p464 = pneg %p463
      $region22: #{tpu_custom_call.1} parent=5 // pred_check_branch
        %466 = sbr.rel (%p464) target = $region24
      $region23: #{tpu_custom_call.1} parent=5 // pred_region
        // Predicated region
        $region25: #{tpu_custom_call.1} parent=23 // pred_check
          %p467 = pneg %p56
        $region26: #{tpu_custom_call.1} parent=23 // pred_check_branch
          %469 = sbr.rel (%p467) target = $region28
        $region27: #{tpu_custom_call.1} parent=23 // pred_region
          %p470 = scmp.lt.s32.totalorder %s31, 1
          %s471 = scalar_select %p470, %s31, 1
          %s472 = smul.addr %s471, 8
          %s473 = scalar_lea.vmem %s0, %s472
        $region28: #{tpu_custom_call.1} parent=23 // pred_fallthru
          _
        // Predicated region
        $region29: #{tpu_custom_call.1} parent=23 // pred_check
          %p474 = pneg %p82
        $region30: #{tpu_custom_call.1} parent=23 // pred_check_branch
          %476 = sbr.rel (%p474) target = $region32
        $region31: #{tpu_custom_call.1} parent=23 // pred_region
          %p477 = scmp.lt.s32.totalorder %s32, 1
          %s478 = scalar_select %p477, %s32, 1
          %s479 = scalar_lea.vmem %s1, %s478
        $region32: #{tpu_custom_call.1} parent=23 // pred_fallthru
          _
        // Predicated region
        $region33: #{tpu_custom_call.1} parent=23 // pred_check
          %p480 = pneg %p108
        $region34: #{tpu_custom_call.1} parent=23 // pred_check_branch
          %482 = sbr.rel (%p480) target = $region36
        $region35: #{tpu_custom_call.1} parent=23 // pred_region
          %p483 = scmp.lt.s32.totalorder %s32, 1
          %s484 = scalar_select %p483, %s32, 1
          %s485 = scalar_lea.vmem %s2, %s484
        $region36: #{tpu_custom_call.1} parent=23 // pred_fallthru
          _
        // Predicated region
        $region37: #{tpu_custom_call.1} parent=23 // pred_check
          %p486 = pneg %p134
        $region38: #{tpu_custom_call.1} parent=23 // pred_check_branch
          %488 = sbr.rel (%p486) target = $region40
        $region39: #{tpu_custom_call.1} parent=23 // pred_region
          %p489 = scmp.lt.s32.totalorder %s32, 1
          %s490 = scalar_select %p489, %s32, 1
          %s491 = smul.addr %s490, 4
          %s492 = smul.addr %s491, 4
          %s493 = scalar_lea.vmem %s3, %s492
        $region40: #{tpu_custom_call.1} parent=23 // pred_fallthru
          _
        // Predicated region
        $region41: #{tpu_custom_call.1} parent=23 // pred_check
          %p494 = pneg %p160
        $region42: #{tpu_custom_call.1} parent=23 // pred_check_branch
          %496 = sbr.rel (%p494) target = $region44
        $region43: #{tpu_custom_call.1} parent=23 // pred_region
          %p497 = scmp.lt.s32.totalorder %s32, 1
          %s498 = scalar_select %p497, %s32, 1
          %s499 = scalar_lea.vmem %s4, %s498
        $region44: #{tpu_custom_call.1} parent=23 // pred_fallthru
          _
        // Predicated region
        $region45: #{tpu_custom_call.1} parent=23 // pred_check
          %p500 = pneg %p186
        $region46: #{tpu_custom_call.1} parent=23 // pred_check_branch
          %502 = sbr.rel (%p500) target = $region48
        $region47: #{tpu_custom_call.1} parent=23 // pred_region
          %p503 = scmp.lt.s32.totalorder %s32, 1
          %s504 = scalar_select %p503, %s32, 1
          %s505 = smul.addr %s504, 4
          %s506 = smul.addr %s505, 4
          %s507 = scalar_lea.vmem %s5, %s506
        $region48: #{tpu_custom_call.1} parent=23 // pred_fallthru
          _
        // Predicated region
        $region49: #{tpu_custom_call.1} parent=23 // pred_check
          %p508 = pneg %p212
        $region50: #{tpu_custom_call.1} parent=23 // pred_check_branch
          %510 = sbr.rel (%p508) target = $region52
        $region51: #{tpu_custom_call.1} parent=23 // pred_region
          %p511 = scmp.lt.s32.totalorder %s32, 1
          %s512 = scalar_select %p511, %s32, 1
          %s513 = scalar_lea.vmem %s6, %s512
        $region52: #{tpu_custom_call.1} parent=23 // pred_fallthru
          _
        // Predicated region
        $region53: #{tpu_custom_call.1} parent=23 // pred_check
          %p514 = pneg %p238
        $region54: #{tpu_custom_call.1} parent=23 // pred_check_branch
          %516 = sbr.rel (%p514) target = $region56
        $region55: #{tpu_custom_call.1} parent=23 // pred_region
          %p517 = scmp.lt.s32.totalorder %s32, 1
          %s518 = scalar_select %p517, %s32, 1
          %s519 = scalar_lea.vmem %s7, %s518
        $region56: #{tpu_custom_call.1} parent=23 // pred_fallthru
          _
        // Predicated region
        $region57: #{tpu_custom_call.1} parent=23 // pred_check
          %p520 = pneg %p264
        $region58: #{tpu_custom_call.1} parent=23 // pred_check_branch
          %522 = sbr.rel (%p520) target = $region60
        $region59: #{tpu_custom_call.1} parent=23 // pred_region
          %p523 = scmp.lt.s32.totalorder %s32, 1
          %s524 = scalar_select %p523, %s32, 1
          %s525 = scalar_lea.vmem %s8, %s524
        $region60: #{tpu_custom_call.1} parent=23 // pred_fallthru
          _
        // Predicated region
        $region61: #{tpu_custom_call.1} parent=23 // pred_check
          %p526 = pneg %p290
        $region62: #{tpu_custom_call.1} parent=23 // pred_check_branch
          %528 = sbr.rel (%p526) target = $region64
        $region63: #{tpu_custom_call.1} parent=23 // pred_region
          %p529 = scmp.lt.s32.totalorder %s32, 1
          %s530 = scalar_select %p529, %s32, 1
          %s531 = smul.addr %s530, 4
          %s532 = smul.addr %s531, 4
          %s533 = scalar_lea.vmem %s9, %s532
        $region64: #{tpu_custom_call.1} parent=23 // pred_fallthru
          _
        // Predicated region
        $region65: #{tpu_custom_call.1} parent=23 // pred_check
          %p534 = pneg %p316
        $region66: #{tpu_custom_call.1} parent=23 // pred_check_branch
          %536 = sbr.rel (%p534) target = $region68
        $region67: #{tpu_custom_call.1} parent=23 // pred_region
          %p537 = scmp.lt.s32.totalorder %s32, 1
          %s538 = scalar_select %p537, %s32, 1
          %s539 = scalar_lea.vmem %s10, %s538
        $region68: #{tpu_custom_call.1} parent=23 // pred_fallthru
          _
        // Predicated region
        $region69: #{tpu_custom_call.1} parent=23 // pred_check
          %p540 = pneg %p342
        $region70: #{tpu_custom_call.1} parent=23 // pred_check_branch
          %542 = sbr.rel (%p540) target = $region72
        $region71: #{tpu_custom_call.1} parent=23 // pred_region
          %p543 = scmp.lt.s32.totalorder %s32, 1
          %s544 = scalar_select %p543, %s32, 1
          %s545 = smul.addr %s544, 16
          %s546 = smul.addr %s545, 4
          %s547 = scalar_lea.vmem %s11, %s546
        $region72: #{tpu_custom_call.1} parent=23 // pred_fallthru
          _
        // Predicated region
        $region73: #{tpu_custom_call.1} parent=23 // pred_check
          %p548 = pneg %p368
        $region74: #{tpu_custom_call.1} parent=23 // pred_check_branch
          %550 = sbr.rel (%p548) target = $region76
        $region75: #{tpu_custom_call.1} parent=23 // pred_region
          %p551 = scmp.lt.s32.totalorder %s32, 1
          %s552 = scalar_select %p551, %s32, 1
          %s553 = scalar_lea.vmem %s12, %s552
        $region76: #{tpu_custom_call.1} parent=23 // pred_fallthru
          _
      $region24: #{tpu_custom_call.1} parent=5 // pred_fallthru
        _
      %p554 = scmp.le.s32.totalorder 1, %s24
      %p555 = scmp.lt.s32.totalorder %s24, 5
      %p556 = pnand %p554, %p555
      %p557 = pneg %p556
      // Predicated region
      $region77: #{tpu_custom_call.1} parent=5 // pred_check
        _
      $region78: #{tpu_custom_call.1} parent=5 // pred_check_branch
        %559 = sbr.rel (%p556) target = $region80
      $region79: #{tpu_custom_call.1} parent=5 // pred_region
        %s560 = ssub.s32 %s24, 1
        %p561 = scmp.lt.s32.totalorder %s33, 1
        %s562 = scalar_select %p561, %s33, 1
        %s563 = smul.addr %s562, 8
        %s564 = scalar_lea.vmem %s0, %s563
        %p565 = pneg %p62
        %p566 = pneg %p59
        %p567 = scmp.lt.s32.totalorder %s34, 1
        %s568 = scalar_select %p567, %s34, 1
        %s569 = scalar_lea.vmem %s1, %s568
        %p570 = pneg %p88
        %p571 = pneg %p85
        %p572 = scmp.lt.s32.totalorder %s34, 1
        %s573 = scalar_select %p572, %s34, 1
        %s574 = scalar_lea.vmem %s2, %s573
        %p575 = pneg %p114
        %p576 = pneg %p111
        %p577 = scmp.lt.s32.totalorder %s34, 1
        %s578 = scalar_select %p577, %s34, 1
        %s579 = smul.addr %s578, 4
        %s580 = smul.addr %s579, 4
        %s581 = scalar_lea.vmem %s3, %s580
        %p582 = pneg %p140
        %p583 = pneg %p137
        %p584 = scmp.lt.s32.totalorder %s34, 1
        %s585 = scalar_select %p584, %s34, 1
        %s586 = scalar_lea.vmem %s4, %s585
        %p587 = pneg %p166
        %p588 = pneg %p163
        %p589 = scmp.lt.s32.totalorder %s34, 1
        %s590 = scalar_select %p589, %s34, 1
        %s591 = smul.addr %s590, 4
        %s592 = smul.addr %s591, 4
        %s593 = scalar_lea.vmem %s5, %s592
        %p594 = pneg %p192
        %p595 = pneg %p189
        %p596 = scmp.lt.s32.totalorder %s34, 1
        %s597 = scalar_select %p596, %s34, 1
        %s598 = scalar_lea.vmem %s6, %s597
        %p599 = pneg %p218
        %p600 = pneg %p215
        %p601 = scmp.lt.s32.totalorder %s34, 1
        %s602 = scalar_select %p601, %s34, 1
        %s603 = scalar_lea.vmem %s7, %s602
        %p604 = pneg %p244
        %p605 = pneg %p241
        %p606 = scmp.lt.s32.totalorder %s34, 1
        %s607 = scalar_select %p606, %s34, 1
        %s608 = scalar_lea.vmem %s8, %s607
        %p609 = pneg %p270
        %p610 = pneg %p267
        %p611 = scmp.lt.s32.totalorder %s34, 1
        %s612 = scalar_select %p611, %s34, 1
        %s613 = smul.addr %s612, 4
        %s614 = smul.addr %s613, 4
        %s615 = scalar_lea.vmem %s9, %s614
        %p616 = pneg %p296
        %p617 = pneg %p293
        %p618 = scmp.lt.s32.totalorder %s34, 1
        %s619 = scalar_select %p618, %s34, 1
        %s620 = scalar_lea.vmem %s10, %s619
        %p621 = pneg %p322
        %p622 = pneg %p319
        %p623 = scmp.lt.s32.totalorder %s34, 1
        %s624 = scalar_select %p623, %s34, 1
        %s625 = smul.addr %s624, 16
        %s626 = smul.addr %s625, 4
        %s627 = scalar_lea.vmem %s11, %s626
        %p628 = pneg %p348
        %p629 = pneg %p345
        %p630 = scmp.lt.s32.totalorder %s34, 1
        %s631 = scalar_select %p630, %s34, 1
        %s632 = scalar_lea.vmem %s12, %s631
        %p633 = pneg %p374
        %p634 = pneg %p371
        %p635 = pneg %p395
        %p636 = pneg %p392
        %p637 = pneg %p416
        %p638 = pneg %p413
        %p639 = pneg %p442
        %p640 = pneg %p439
        %s641 = sand.u32 %s429, 1
        %s642 = scalar_lea.sflag [#allocation3], %s641
        %s643 = sand.u32 %s429, 1
        %s644 = smul.addr %s643, 8
        %s645 = scalar_lea.vmem [#allocation2], %s644
        %p646 = scmp.lt.s32.totalorder %s33, 1
        %s647 = scalar_select %p646, %s33, 1
        %s648 = smul.addr %s647, 8
        %s649 = scalar_lea.vmem %s0, %s648
        %p650 = scmp.lt.s32.totalorder %s34, 1
        %s651 = scalar_select %p650, %s34, 1
        %s652 = scalar_lea.vmem %s1, %s651
        %p653 = scmp.lt.s32.totalorder %s34, 1
        %s654 = scalar_select %p653, %s34, 1
        %s655 = scalar_lea.vmem %s2, %s654
        %p656 = scmp.lt.s32.totalorder %s34, 1
        %s657 = scalar_select %p656, %s34, 1
        %s658 = smul.addr %s657, 4
        %s659 = smul.addr %s658, 4
        %s660 = scalar_lea.vmem %s3, %s659
        %p661 = scmp.lt.s32.totalorder %s34, 1
        %s662 = scalar_select %p661, %s34, 1
        %s663 = scalar_lea.vmem %s4, %s662
        %p664 = scmp.lt.s32.totalorder %s34, 1
        %s665 = scalar_select %p664, %s34, 1
        %s666 = smul.addr %s665, 4
        %s667 = smul.addr %s666, 4
        %s668 = scalar_lea.vmem %s5, %s667
        %p669 = scmp.lt.s32.totalorder %s34, 1
        %s670 = scalar_select %p669, %s34, 1
        %s671 = scalar_lea.vmem %s6, %s670
        %p672 = scmp.lt.s32.totalorder %s34, 1
        %s673 = scalar_select %p672, %s34, 1
        %s674 = scalar_lea.vmem %s7, %s673
        %p675 = scmp.lt.s32.totalorder %s34, 1
        %s676 = scalar_select %p675, %s34, 1
        %s677 = scalar_lea.vmem %s8, %s676
        %p678 = scmp.lt.s32.totalorder %s34, 1
        %s679 = scalar_select %p678, %s34, 1
        %s680 = smul.addr %s679, 4
        %s681 = smul.addr %s680, 4
        %s682 = scalar_lea.vmem %s9, %s681
        %p683 = scmp.lt.s32.totalorder %s34, 1
        %s684 = scalar_select %p683, %s34, 1
        %s685 = scalar_lea.vmem %s10, %s684
        %p686 = scmp.lt.s32.totalorder %s34, 1
        %s687 = scalar_select %p686, %s34, 1
        %s688 = smul.addr %s687, 16
        %s689 = smul.addr %s688, 4
        %s690 = scalar_lea.vmem %s11, %s689
        %p691 = scmp.lt.s32.totalorder %s34, 1
        %s692 = scalar_select %p691, %s34, 1
        %s693 = scalar_lea.vmem %s12, %s692
        %p695 = scmp.eq.s32.totalorder %s34, 0
        // Predicated region
        $region81: #{tpu_custom_call.1} parent=79 // pred_check
          %p696 = pneg %p695
        $region82: #{tpu_custom_call.1} parent=79 // pred_check_branch
          %698 = sbr.rel (%p696) target = $region84
        $region83: #{tpu_custom_call.1} parent=79 // pred_region
          %v699 = vld [vmem:[%s649] sm:$0xff]
          %vm700 = vcmask 261120
          %701 = vst.msk [vmem:[%s645] sm:$0xff] %vm700, %v699
        $region84: #{tpu_custom_call.1} parent=79 // pred_fallthru
          _
        %v702 = vld [vmem:[%s645] sm:$0xff]
        %v703 = vld [vmem:[%s652] sm:$0x1]
        %v704 = vld [vmem:[%s655] sm:$0x1]
        %vm705 = vcmask 261120
        %v706 = vsel %vm705, %v702, 0.0
        %707 = vadd.xlane.f32.xlu0 %v706
        %v708 = vpop.xlane.xlu0 %707
        %v709 = vrcp.pop 32.0
        %v710 = vmul.f32 %v708, %v709
        %v711 = vsub.f32 %v702, %v710
        %v712 = vmul.f32 %v711, %v711
        %v713 = vsel %vm705, %v712, 0.0
        %714 = vadd.xlane.f32.xlu0 %v713
        %v715 = vpop.xlane.xlu0 %714
        %v716 = vmul.f32 %v715, %v709
        %v717 = vadd.f32 %v716, 1e-06
        %v718 = vrsqrt.pop %v717
        %v719 = vmul.f32 %v711, %v718
        %v721 = vlaneseq
        %v722 = vshrl.u32 %v721, 7
        %v723 = vsub.s32 0, %v722
        %v724 = vrot.slane %v703, %v723
        %v726 = vmul.f32 %v719, %v724
        %v728 = vlaneseq
        %v729 = vshrl.u32 %v728, 7
        %v730 = vsub.s32 0, %v729
        %v731 = vrot.slane %v704, %v730
        %v733 = vadd.f32 %v726, %v731
        %v734 = vpack.c.bf16 %v733, %v733
        %v735 = vld [vmem:[%s660] sm:$0xf]
        %v736 = vld [vmem:[%s660 + $0x4] sm:$0xf]
        %v737 = vld [vmem:[%s660 + $0x8] sm:$0xf]
        %v738 = vld [vmem:[%s660 + $0xc] sm:$0xf]
        %v739 = vld [vmem:[%s663] sm:$0x1]
        %v741 = vlaneseq
        %v742 = vshrl.u32 %v741, 7
        %v743 = vsub.s32 0, %v742
        %v744 = vrot.slane %v739, %v743
        %v750 = vunpack.c.l.b16 %v735
        %v751 = vunpack.c.l.b16 %v736
        %v752 = vunpack.c.l.b16 %v737
        %v753 = vunpack.c.l.b16 %v738
        %v754 = vpack.c.b16 %v751, %v750
        %v755 = vpack.c.b16 %v753, %v752
        %v759 = vsel %vm705, %v734, 0
        %761 = vmatprep.subr.bf16.mxu0 0
        %762 = vmatpush1.bf16.msra.mxu0 0
        %763 = vmatprep.subr.bf16.mxu0 0
        %764 = vmatpush1.bf16.msra.mxu0 0
        %765 = vmatprep.subr.bf16.mxu0 0
        %766 = vmatpush1.bf16.msra.mxu0 0
        %767 = vmatprep.subr.bf16.mxu0 0
        %768 = vmatpush1.bf16.msra.mxu0 0
        %769 = vmatprep.subr.bf16.mxu0 0
        %770 = vmatpush1.bf16.msra.mxu0 0
        %771 = vmatprep.subr.bf16.mxu0 0
        %772 = vmatpush1.bf16.msra.mxu0 0
        %773 = vmatprep.subr.bf16.mxu0 0
        %774 = vmatpush1.bf16.msra.mxu0 %v755
        %775 = vmatprep.subr.bf16.mxu0 0
        %776 = vmatpush1.bf16.msra.mxu0 %v754
        %777 = vmatprep.subr.bf16.mxu0 0
        %778 = vmatpush2.bf16.msra.mxu0 0
        %779 = vmatprep.subr.bf16.mxu0 0
        %780 = vmatpush2.bf16.msra.mxu0 0
        %781 = vmatprep.subr.bf16.mxu0 0
        %782 = vmatpush2.bf16.msra.mxu0 0
        %783 = vmatprep.subr.bf16.mxu0 0
        %784 = vmatpush2.bf16.msra.mxu0 0
        %785 = vmatprep.subr.bf16.mxu0 0
        %786 = vmatpush2.bf16.msra.mxu0 0
        %787 = vmatprep.subr.bf16.mxu0 0
        %788 = vmatpush2.bf16.msra.mxu0 0
        %789 = vmatprep.subr.bf16.mxu0 0
        %790 = vmatpush2.bf16.msra.mxu0 0
        %791 = vmatprep.subr.bf16.mxu0 0
        %792 = vmatpush2.bf16.msra.mxu0 0
        %793 = vmatprep.mubr.bf16.mxu0 0
        %794 = vmatmul.mubr.bf16.gmra.mxu0 %v759
        %v795 = vpop.f32.mrf.mxu0
        %v796 = vadd.f32 %v744, %v795
        %v797 = vpop.f32.mrf.mxu0
        %v798 = vpop.f32.mrf.mxu0
        %v799 = vpop.f32.mrf.mxu0
        %800 = vdwg.mxu0
        %v801 = vpack.c.bf16 %v796, %v796
        %803 = vrot.lane.b32.xlu0 %v801, 120
        %v804 = vpop.permute.xlu0 %803
        %805 = vrot.lane.b32.xlu0 %v801, 112
        %v806 = vpop.permute.xlu0 %805
        %807 = vrot.lane.b32.xlu0 %v801, 104
        %v808 = vpop.permute.xlu0 %807
        %v810 = vunpack.c.l.s4 1983009808
        %v811 = vunpack.c.0.s8 %v810
        %v812 = vlaneseq
        %v813 = vshrl.u32 %v812, 7
        %v814 = vsub.s32 %v811, %v813
        %v815 = vrot.slane %v801, %v814
        %v818 = vunpack.c.l.s4 1983009808
        %v819 = vunpack.c.0.s8 %v818
        %v820 = vlaneseq
        %v821 = vshrl.u32 %v820, 7
        %v822 = vsub.s32 %v819, %v821
        %v823 = vrot.slane %v806, %v822
        %v824 = vcombine.low %v815, %v823
        %v825 = vcombine.high %v815, %v823
        %v827 = vunpack.c.l.s4 1934713408
        %v828 = vunpack.c.0.s8 %v827
        %v829 = vlaneseq
        %v830 = vshrl.u32 %v829, 7
        %v831 = vsub.s32 %v828, %v830
        %v832 = vrot.slane %v824, %v831
        %v834 = vunpack.c.l.s4 1934713408
        %v835 = vunpack.c.0.s8 %v834
        %v836 = vlaneseq
        %v837 = vshrl.u32 %v836, 7
        %v838 = vsub.s32 %v835, %v837
        %v839 = vrot.slane %v825, %v838
        %v840 = vcombine.high %v832, 0
        %v841 = vcombine.high %v839, 0
        %v844 = vunpack.c.l.s4 1983009808
        %v845 = vunpack.c.0.s8 %v844
        %v846 = vlaneseq
        %v847 = vshrl.u32 %v846, 7
        %v848 = vsub.s32 %v845, %v847
        %v849 = vrot.slane %v804, %v848
        %v852 = vunpack.c.l.s4 1983009808
        %v853 = vunpack.c.0.s8 %v852
        %v854 = vlaneseq
        %v855 = vshrl.u32 %v854, 7
        %v856 = vsub.s32 %v853, %v855
        %v857 = vrot.slane %v808, %v856
        %v858 = vcombine.low %v849, %v857
        %v859 = vcombine.high %v849, %v857
        %v861 = vunpack.c.l.s4 1934713408
        %v862 = vunpack.c.0.s8 %v861
        %v863 = vlaneseq
        %v864 = vshrl.u32 %v863, 7
        %v865 = vsub.s32 %v862, %v864
        %v866 = vrot.slane %v858, %v865
        %v868 = vunpack.c.l.s4 1934713408
        %v869 = vunpack.c.0.s8 %v868
        %v870 = vlaneseq
        %v871 = vshrl.u32 %v870, 7
        %v872 = vsub.s32 %v869, %v871
        %v873 = vrot.slane %v859, %v872
        %v874 = vcombine.high %v866, 0
        %v875 = vcombine.high %v873, 0
        %v878 = vpack.i.b16 %v866, %v832
        %v880 = vshrl.u32 %v832, 16
        %v881 = vshrl.u32 %v866, 16
        %v882 = vpack.i.b16 %v881, %v880
        %v886 = vpack.i.b16 %v874, %v840
        %v888 = vshrl.u32 %v840, 16
        %v889 = vshrl.u32 %v874, 16
        %v890 = vpack.i.b16 %v889, %v888
        %v894 = vpack.i.b16 %v873, %v839
        %v896 = vshrl.u32 %v839, 16
        %v897 = vshrl.u32 %v873, 16
        %v898 = vpack.i.b16 %v897, %v896
        %v902 = vpack.i.b16 %v875, %v841
        %v904 = vshrl.u32 %v841, 16
        %v905 = vshrl.u32 %v875, 16
        %v906 = vpack.i.b16 %v905, %v904
        %v908 = vcombine.low %v878, %v894
        %v910 = vunpack.c.l.s4 1983009808
        %v911 = vunpack.c.0.s8 %v910
        %v912 = vlaneseq
        %v913 = vshrl.u32 %v912, 7
        %v914 = vsub.s32 %v911, %v913
        %v915 = vrot.slane %v908, %v914
        %v916 = vcombine.low %v886, %v902
        %v918 = vunpack.c.l.s4 1983009808
        %v919 = vunpack.c.0.s8 %v918
        %v920 = vlaneseq
        %v921 = vshrl.u32 %v920, 7
        %v922 = vsub.s32 %v919, %v921
        %v923 = vrot.slane %v916, %v922
        %v924 = vcombine.low %v915, %v923
        %v926 = vunpack.c.l.s4 1934713408
        %v927 = vunpack.c.0.s8 %v926
        %v928 = vlaneseq
        %v929 = vshrl.u32 %v928, 7
        %v930 = vsub.s32 %v927, %v929
        %v931 = vrot.slane %v924, %v930
        %v932 = vcombine.high %v931, 0
        %v933 = vcombine.low %v882, %v898
        %v935 = vunpack.c.l.s4 1983009808
        %v936 = vunpack.c.0.s8 %v935
        %v937 = vlaneseq
        %v938 = vshrl.u32 %v937, 7
        %v939 = vsub.s32 %v936, %v938
        %v940 = vrot.slane %v933, %v939
        %v941 = vcombine.low %v890, %v906
        %v943 = vunpack.c.l.s4 1983009808
        %v944 = vunpack.c.0.s8 %v943
        %v945 = vlaneseq
        %v946 = vshrl.u32 %v945, 7
        %v947 = vsub.s32 %v944, %v946
        %v948 = vrot.slane %v941, %v947
        %v949 = vcombine.low %v940, %v948
        %v951 = vunpack.c.l.s4 1934713408
        %v952 = vunpack.c.0.s8 %v951
        %v953 = vlaneseq
        %v954 = vshrl.u32 %v953, 7
        %v955 = vsub.s32 %v952, %v954
        %v956 = vrot.slane %v949, %v955
        %v957 = vcombine.high %v956, 0
        %v960 = vpack.i.b16 %v956, %v931
        %v961 = vshrl.u32 %v931, 16
        %v962 = vshrl.u32 %v956, 16
        %v963 = vpack.i.b16 %v962, %v961
        %v966 = vpack.i.b16 %v957, %v932
        %v967 = vshrl.u32 %v932, 16
        %v968 = vshrl.u32 %v957, 16
        %v969 = vpack.i.b16 %v968, %v967
        %970 = vrot.lane.b32.xlu0 %v801, 96
        %v971 = vpop.permute.xlu0 %970
        %972 = vrot.lane.b32.xlu0 %v804, 96
        %v973 = vpop.permute.xlu0 %972
        %974 = vrot.lane.b32.xlu0 %v806, 96
        %v975 = vpop.permute.xlu0 %974
        %976 = vrot.lane.b32.xlu0 %v808, 96
        %v977 = vpop.permute.xlu0 %976
        %v980 = vunpack.c.l.s4 1983009808
        %v981 = vunpack.c.0.s8 %v980
        %v982 = vlaneseq
        %v983 = vshrl.u32 %v982, 7
        %v984 = vsub.s32 %v981, %v983
        %v985 = vrot.slane %v971, %v984
        %v988 = vunpack.c.l.s4 1983009808
        %v989 = vunpack.c.0.s8 %v988
        %v990 = vlaneseq
        %v991 = vshrl.u32 %v990, 7
        %v992 = vsub.s32 %v989, %v991
        %v993 = vrot.slane %v975, %v992
        %v994 = vcombine.low %v985, %v993
        %v995 = vcombine.high %v985, %v993
        %v997 = vunpack.c.l.s4 1934713408
        %v998 = vunpack.c.0.s8 %v997
        %v999 = vlaneseq
        %v1000 = vshrl.u32 %v999, 7
        %v1001 = vsub.s32 %v998, %v1000
        %v1002 = vrot.slane %v994, %v1001
        %v1004 = vunpack.c.l.s4 1934713408
        %v1005 = vunpack.c.0.s8 %v1004
        %v1006 = vlaneseq
        %v1007 = vshrl.u32 %v1006, 7
        %v1008 = vsub.s32 %v1005, %v1007
        %v1009 = vrot.slane %v995, %v1008
        %v1010 = vcombine.high %v1002, 0
        %v1011 = vcombine.high %v1009, 0
        %v1014 = vunpack.c.l.s4 1983009808
        %v1015 = vunpack.c.0.s8 %v1014
        %v1016 = vlaneseq
        %v1017 = vshrl.u32 %v1016, 7
        %v1018 = vsub.s32 %v1015, %v1017
        %v1019 = vrot.slane %v973, %v1018
        %v1022 = vunpack.c.l.s4 1983009808
        %v1023 = vunpack.c.0.s8 %v1022
        %v1024 = vlaneseq
        %v1025 = vshrl.u32 %v1024, 7
        %v1026 = vsub.s32 %v1023, %v1025
        %v1027 = vrot.slane %v977, %v1026
        %v1028 = vcombine.low %v1019, %v1027
        %v1029 = vcombine.high %v1019, %v1027
        %v1031 = vunpack.c.l.s4 1934713408
        %v1032 = vunpack.c.0.s8 %v1031
        %v1033 = vlaneseq
        %v1034 = vshrl.u32 %v1033, 7
        %v1035 = vsub.s32 %v1032, %v1034
        %v1036 = vrot.slane %v1028, %v1035
        %v1038 = vunpack.c.l.s4 1934713408
        %v1039 = vunpack.c.0.s8 %v1038
        %v1040 = vlaneseq
        %v1041 = vshrl.u32 %v1040, 7
        %v1042 = vsub.s32 %v1039, %v1041
        %v1043 = vrot.slane %v1029, %v1042
        %v1044 = vcombine.high %v1036, 0
        %v1045 = vcombine.high %v1043, 0
        %v1048 = vpack.i.b16 %v1036, %v1002
        %v1050 = vshrl.u32 %v1002, 16
        %v1051 = vshrl.u32 %v1036, 16
        %v1052 = vpack.i.b16 %v1051, %v1050
        %v1056 = vpack.i.b16 %v1044, %v1010
        %v1058 = vshrl.u32 %v1010, 16
        %v1059 = vshrl.u32 %v1044, 16
        %v1060 = vpack.i.b16 %v1059, %v1058
        %v1064 = vpack.i.b16 %v1043, %v1009
        %v1066 = vshrl.u32 %v1009, 16
        %v1067 = vshrl.u32 %v1043, 16
        %v1068 = vpack.i.b16 %v1067, %v1066
        %v1072 = vpack.i.b16 %v1045, %v1011
        %v1074 = vshrl.u32 %v1011, 16
        %v1075 = vshrl.u32 %v1045, 16
        %v1076 = vpack.i.b16 %v1075, %v1074
        %v1078 = vcombine.low %v1048, %v1064
        %v1080 = vunpack.c.l.s4 1983009808
        %v1081 = vunpack.c.0.s8 %v1080
        %v1082 = vlaneseq
        %v1083 = vshrl.u32 %v1082, 7
        %v1084 = vsub.s32 %v1081, %v1083
        %v1085 = vrot.slane %v1078, %v1084
        %v1086 = vcombine.low %v1056, %v1072
        %v1088 = vunpack.c.l.s4 1983009808
        %v1089 = vunpack.c.0.s8 %v1088
        %v1090 = vlaneseq
        %v1091 = vshrl.u32 %v1090, 7
        %v1092 = vsub.s32 %v1089, %v1091
        %v1093 = vrot.slane %v1086, %v1092
        %v1094 = vcombine.low %v1085, %v1093
        %v1096 = vunpack.c.l.s4 1934713408
        %v1097 = vunpack.c.0.s8 %v1096
        %v1098 = vlaneseq
        %v1099 = vshrl.u32 %v1098, 7
        %v1100 = vsub.s32 %v1097, %v1099
        %v1101 = vrot.slane %v1094, %v1100
        %v1102 = vcombine.high %v1101, 0
        %v1103 = vcombine.low %v1052, %v1068
        %v1105 = vunpack.c.l.s4 1983009808
        %v1106 = vunpack.c.0.s8 %v1105
        %v1107 = vlaneseq
        %v1108 = vshrl.u32 %v1107, 7
        %v1109 = vsub.s32 %v1106, %v1108
        %v1110 = vrot.slane %v1103, %v1109
        %v1111 = vcombine.low %v1060, %v1076
        %v1113 = vunpack.c.l.s4 1983009808
        %v1114 = vunpack.c.0.s8 %v1113
        %v1115 = vlaneseq
        %v1116 = vshrl.u32 %v1115, 7
        %v1117 = vsub.s32 %v1114, %v1116
        %v1118 = vrot.slane %v1111, %v1117
        %v1119 = vcombine.low %v1110, %v1118
        %v1121 = vunpack.c.l.s4 1934713408
        %v1122 = vunpack.c.0.s8 %v1121
        %v1123 = vlaneseq
        %v1124 = vshrl.u32 %v1123, 7
        %v1125 = vsub.s32 %v1122, %v1124
        %v1126 = vrot.slane %v1119, %v1125
        %v1127 = vcombine.high %v1126, 0
        %v1130 = vpack.i.b16 %v1126, %v1101
        %v1131 = vshrl.u32 %v1101, 16
        %v1132 = vshrl.u32 %v1126, 16
        %v1133 = vpack.i.b16 %v1132, %v1131
        %v1136 = vpack.i.b16 %v1127, %v1102
        %v1137 = vshrl.u32 %v1102, 16
        %v1138 = vshrl.u32 %v1127, 16
        %v1139 = vpack.i.b16 %v1138, %v1137
        %1140 = vrot.lane.b32.xlu0 %v801, 64
        %v1141 = vpop.permute.xlu0 %1140
        %1142 = vrot.lane.b32.xlu0 %v804, 64
        %v1143 = vpop.permute.xlu0 %1142
        %1144 = vrot.lane.b32.xlu0 %v806, 64
        %v1145 = vpop.permute.xlu0 %1144
        %1146 = vrot.lane.b32.xlu0 %v808, 64
        %v1147 = vpop.permute.xlu0 %1146
        %v1150 = vunpack.c.l.s4 1983009808
        %v1151 = vunpack.c.0.s8 %v1150
        %v1152 = vlaneseq
        %v1153 = vshrl.u32 %v1152, 7
        %v1154 = vsub.s32 %v1151, %v1153
        %v1155 = vrot.slane %v1141, %v1154
        %v1158 = vunpack.c.l.s4 1983009808
        %v1159 = vunpack.c.0.s8 %v1158
        %v1160 = vlaneseq
        %v1161 = vshrl.u32 %v1160, 7
        %v1162 = vsub.s32 %v1159, %v1161
        %v1163 = vrot.slane %v1145, %v1162
        %v1164 = vcombine.low %v1155, %v1163
        %v1165 = vcombine.high %v1155, %v1163
        %v1167 = vunpack.c.l.s4 1934713408
        %v1168 = vunpack.c.0.s8 %v1167
        %v1169 = vlaneseq
        %v1170 = vshrl.u32 %v1169, 7
        %v1171 = vsub.s32 %v1168, %v1170
        %v1172 = vrot.slane %v1164, %v1171
        %v1174 = vunpack.c.l.s4 1934713408
        %v1175 = vunpack.c.0.s8 %v1174
        %v1176 = vlaneseq
        %v1177 = vshrl.u32 %v1176, 7
        %v1178 = vsub.s32 %v1175, %v1177
        %v1179 = vrot.slane %v1165, %v1178
        %v1180 = vcombine.high %v1172, 0
        %v1181 = vcombine.high %v1179, 0
        %v1184 = vunpack.c.l.s4 1983009808
        %v1185 = vunpack.c.0.s8 %v1184
        %v1186 = vlaneseq
        %v1187 = vshrl.u32 %v1186, 7
        %v1188 = vsub.s32 %v1185, %v1187
        %v1189 = vrot.slane %v1143, %v1188
        %v1192 = vunpack.c.l.s4 1983009808
        %v1193 = vunpack.c.0.s8 %v1192
        %v1194 = vlaneseq
        %v1195 = vshrl.u32 %v1194, 7
        %v1196 = vsub.s32 %v1193, %v1195
        %v1197 = vrot.slane %v1147, %v1196
        %v1198 = vcombine.low %v1189, %v1197
        %v1199 = vcombine.high %v1189, %v1197
        %v1201 = vunpack.c.l.s4 1934713408
        %v1202 = vunpack.c.0.s8 %v1201
        %v1203 = vlaneseq
        %v1204 = vshrl.u32 %v1203, 7
        %v1205 = vsub.s32 %v1202, %v1204
        %v1206 = vrot.slane %v1198, %v1205
        %v1208 = vunpack.c.l.s4 1934713408
        %v1209 = vunpack.c.0.s8 %v1208
        %v1210 = vlaneseq
        %v1211 = vshrl.u32 %v1210, 7
        %v1212 = vsub.s32 %v1209, %v1211
        %v1213 = vrot.slane %v1199, %v1212
        %v1214 = vcombine.high %v1206, 0
        %v1215 = vcombine.high %v1213, 0
        %v1218 = vpack.i.b16 %v1206, %v1172
        %v1220 = vshrl.u32 %v1172, 16
        %v1221 = vshrl.u32 %v1206, 16
        %v1222 = vpack.i.b16 %v1221, %v1220
        %v1226 = vpack.i.b16 %v1214, %v1180
        %v1228 = vshrl.u32 %v1180, 16
        %v1229 = vshrl.u32 %v1214, 16
        %v1230 = vpack.i.b16 %v1229, %v1228
        %v1234 = vpack.i.b16 %v1213, %v1179
        %v1236 = vshrl.u32 %v1179, 16
        %v1237 = vshrl.u32 %v1213, 16
        %v1238 = vpack.i.b16 %v1237, %v1236
        %v1242 = vpack.i.b16 %v1215, %v1181
        %v1244 = vshrl.u32 %v1181, 16
        %v1245 = vshrl.u32 %v1215, 16
        %v1246 = vpack.i.b16 %v1245, %v1244
        %v1248 = vcombine.low %v1218, %v1234
        %v1250 = vunpack.c.l.s4 1983009808
        %v1251 = vunpack.c.0.s8 %v1250
        %v1252 = vlaneseq
        %v1253 = vshrl.u32 %v1252, 7
        %v1254 = vsub.s32 %v1251, %v1253
        %v1255 = vrot.slane %v1248, %v1254
        %v1256 = vcombine.low %v1226, %v1242
        %v1258 = vunpack.c.l.s4 1983009808
        %v1259 = vunpack.c.0.s8 %v1258
        %v1260 = vlaneseq
        %v1261 = vshrl.u32 %v1260, 7
        %v1262 = vsub.s32 %v1259, %v1261
        %v1263 = vrot.slane %v1256, %v1262
        %v1264 = vcombine.low %v1255, %v1263
        %v1266 = vunpack.c.l.s4 1934713408
        %v1267 = vunpack.c.0.s8 %v1266
        %v1268 = vlaneseq
        %v1269 = vshrl.u32 %v1268, 7
        %v1270 = vsub.s32 %v1267, %v1269
        %v1271 = vrot.slane %v1264, %v1270
        %v1272 = vcombine.high %v1271, 0
        %v1273 = vcombine.low %v1222, %v1238
        %v1275 = vunpack.c.l.s4 1983009808
        %v1276 = vunpack.c.0.s8 %v1275
        %v1277 = vlaneseq
        %v1278 = vshrl.u32 %v1277, 7
        %v1279 = vsub.s32 %v1276, %v1278
        %v1280 = vrot.slane %v1273, %v1279
        %v1281 = vcombine.low %v1230, %v1246
        %v1283 = vunpack.c.l.s4 1983009808
        %v1284 = vunpack.c.0.s8 %v1283
        %v1285 = vlaneseq
        %v1286 = vshrl.u32 %v1285, 7
        %v1287 = vsub.s32 %v1284, %v1286
        %v1288 = vrot.slane %v1281, %v1287
        %v1289 = vcombine.low %v1280, %v1288
        %v1291 = vunpack.c.l.s4 1934713408
        %v1292 = vunpack.c.0.s8 %v1291
        %v1293 = vlaneseq
        %v1294 = vshrl.u32 %v1293, 7
        %v1295 = vsub.s32 %v1292, %v1294
        %v1296 = vrot.slane %v1289, %v1295
        %v1297 = vcombine.high %v1296, 0
        %v1300 = vpack.i.b16 %v1296, %v1271
        %v1301 = vshrl.u32 %v1271, 16
        %v1302 = vshrl.u32 %v1296, 16
        %v1303 = vpack.i.b16 %v1302, %v1301
        %v1306 = vpack.i.b16 %v1297, %v1272
        %v1307 = vshrl.u32 %v1272, 16
        %v1308 = vshrl.u32 %v1297, 16
        %v1309 = vpack.i.b16 %v1308, %v1307
        %vm1310 = vcmask 64512
        %v1312 = vsel %vm1310, %v960, 0
        %v1315 = vsel %vm1310, %v1130, 0
        %1317 = vmatprep.subr.bf16.mxu0 0
        %1318 = vmatpush1.bf16.xpose.msra.mxu0 0
        %1319 = vmatprep.subr.bf16.mxu0 0
        %1320 = vmatpush1.bf16.xpose.msra.mxu0 0
        %1321 = vmatprep.subr.bf16.mxu0 0
        %1322 = vmatpush1.bf16.xpose.msra.mxu0 0
        %1323 = vmatprep.subr.bf16.mxu0 0
        %1324 = vmatpush1.bf16.xpose.msra.mxu0 0
        %1325 = vmatprep.subr.bf16.mxu0 0
        %1326 = vmatpush1.bf16.xpose.msra.mxu0 0
        %1327 = vmatprep.subr.bf16.mxu0 0
        %1328 = vmatpush1.bf16.xpose.msra.mxu0 0
        %1329 = vmatprep.subr.bf16.mxu0 0
        %1330 = vmatpush1.bf16.xpose.msra.mxu0 0
        %1331 = vmatprep.subr.bf16.mxu0 0
        %1332 = vmatpush1.bf16.xpose.msra.mxu0 %v1315
        %1333 = vmatprep.subr.bf16.mxu0 0
        %1334 = vmatpush2.bf16.xpose.msra.mxu0 0
        %1335 = vmatprep.subr.bf16.mxu0 0
        %1336 = vmatpush2.bf16.xpose.msra.mxu0 0
        %1337 = vmatprep.subr.bf16.mxu0 0
        %1338 = vmatpush2.bf16.xpose.msra.mxu0 0
        %1339 = vmatprep.subr.bf16.mxu0 0
        %1340 = vmatpush2.bf16.xpose.msra.mxu0 0
        %1341 = vmatprep.subr.bf16.mxu0 0
        %1342 = vmatpush2.bf16.xpose.msra.mxu0 0
        %1343 = vmatprep.subr.bf16.mxu0 0
        %1344 = vmatpush2.bf16.xpose.msra.mxu0 0
        %1345 = vmatprep.subr.bf16.mxu0 0
        %1346 = vmatpush2.bf16.xpose.msra.mxu0 0
        %1347 = vmatprep.subr.bf16.mxu0 0
        %1348 = vmatpush2.bf16.xpose.msra.mxu0 0
        %1349 = vmatprep.mubr.bf16.mxu0 0
        %1350 = vmatmul.mubr.bf16.gmra.mxu0 %v1312
        %v1351 = vpop.f32.mrf.mxu0
        %v1352 = vadd.f32 0.0, %v1351
        %v1353 = vpop.f32.mrf.mxu0
        %v1354 = vpop.f32.mrf.mxu0
        %v1355 = vpop.f32.mrf.mxu0
        %1356 = vdwg.mxu0
        %v1358 = vsel %vm1310, %v963, 0
        %v1361 = vsel %vm1310, %v1133, 0
        %1363 = vmatprep.subr.bf16.mxu0 0
        %1364 = vmatpush1.bf16.xpose.msra.mxu0 0
        %1365 = vmatprep.subr.bf16.mxu0 0
        %1366 = vmatpush1.bf16.xpose.msra.mxu0 0
        %1367 = vmatprep.subr.bf16.mxu0 0
        %1368 = vmatpush1.bf16.xpose.msra.mxu0 0
        %1369 = vmatprep.subr.bf16.mxu0 0
        %1370 = vmatpush1.bf16.xpose.msra.mxu0 0
        %1371 = vmatprep.subr.bf16.mxu0 0
        %1372 = vmatpush1.bf16.xpose.msra.mxu0 0
        %1373 = vmatprep.subr.bf16.mxu0 0
        %1374 = vmatpush1.bf16.xpose.msra.mxu0 0
        %1375 = vmatprep.subr.bf16.mxu0 0
        %1376 = vmatpush1.bf16.xpose.msra.mxu0 0
        %1377 = vmatprep.subr.bf16.mxu0 0
        %1378 = vmatpush1.bf16.xpose.msra.mxu0 %v1361
        %1379 = vmatprep.subr.bf16.mxu0 0
        %1380 = vmatpush2.bf16.xpose.msra.mxu0 0
        %1381 = vmatprep.subr.bf16.mxu0 0
        %1382 = vmatpush2.bf16.xpose.msra.mxu0 0
        %1383 = vmatprep.subr.bf16.mxu0 0
        %1384 = vmatpush2.bf16.xpose.msra.mxu0 0
        %1385 = vmatprep.subr.bf16.mxu0 0
        %1386 = vmatpush2.bf16.xpose.msra.mxu0 0
        %1387 = vmatprep.subr.bf16.mxu0 0
        %1388 = vmatpush2.bf16.xpose.msra.mxu0 0
        %1389 = vmatprep.subr.bf16.mxu0 0
        %1390 = vmatpush2.bf16.xpose.msra.mxu0 0
        %1391 = vmatprep.subr.bf16.mxu0 0
        %1392 = vmatpush2.bf16.xpose.msra.mxu0 0
        %1393 = vmatprep.subr.bf16.mxu0 0
        %1394 = vmatpush2.bf16.xpose.msra.mxu0 0
        %1395 = vmatprep.mubr.bf16.mxu0 0
        %1396 = vmatmul.mubr.bf16.gmra.mxu0 %v1358
        %v1397 = vpop.f32.mrf.mxu0
        %v1398 = vadd.f32 0.0, %v1397
        %v1399 = vpop.f32.mrf.mxu0
        %v1400 = vpop.f32.mrf.mxu0
        %v1401 = vpop.f32.mrf.mxu0
        %1402 = vdwg.mxu0
        %v1404 = vsel %vm1310, %v966, 0
        %v1407 = vsel %vm1310, %v1136, 0
        %1409 = vmatprep.subr.bf16.mxu0 0
        %1410 = vmatpush1.bf16.xpose.msra.mxu0 0
        %1411 = vmatprep.subr.bf16.mxu0 0
        %1412 = vmatpush1.bf16.xpose.msra.mxu0 0
        %1413 = vmatprep.subr.bf16.mxu0 0
        %1414 = vmatpush1.bf16.xpose.msra.mxu0 0
        %1415 = vmatprep.subr.bf16.mxu0 0
        %1416 = vmatpush1.bf16.xpose.msra.mxu0 0
        %1417 = vmatprep.subr.bf16.mxu0 0
        %1418 = vmatpush1.bf16.xpose.msra.mxu0 0
        %1419 = vmatprep.subr.bf16.mxu0 0
        %1420 = vmatpush1.bf16.xpose.msra.mxu0 0
        %1421 = vmatprep.subr.bf16.mxu0 0
        %1422 = vmatpush1.bf16.xpose.msra.mxu0 0
        %1423 = vmatprep.subr.bf16.mxu0 0
        %1424 = vmatpush1.bf16.xpose.msra.mxu0 %v1407
        %1425 = vmatprep.subr.bf16.mxu0 0
        %1426 = vmatpush2.bf16.xpose.msra.mxu0 0
        %1427 = vmatprep.subr.bf16.mxu0 0
        %1428 = vmatpush2.bf16.xpose.msra.mxu0 0
        %1429 = vmatprep.subr.bf16.mxu0 0
        %1430 = vmatpush2.bf16.xpose.msra.mxu0 0
        %1431 = vmatprep.subr.bf16.mxu0 0
        %1432 = vmatpush2.bf16.xpose.msra.mxu0 0
        %1433 = vmatprep.subr.bf16.mxu0 0
        %1434 = vmatpush2.bf16.xpose.msra.mxu0 0
        %1435 = vmatprep.subr.bf16.mxu0 0
        %1436 = vmatpush2.bf16.xpose.msra.mxu0 0
        %1437 = vmatprep.subr.bf16.mxu0 0
        %1438 = vmatpush2.bf16.xpose.msra.mxu0 0
        %1439 = vmatprep.subr.bf16.mxu0 0
        %1440 = vmatpush2.bf16.xpose.msra.mxu0 0
        %1441 = vmatprep.mubr.bf16.mxu0 0
        %1442 = vmatmul.mubr.bf16.gmra.mxu0 %v1404
        %v1443 = vpop.f32.mrf.mxu0
        %v1444 = vadd.f32 0.0, %v1443
        %v1445 = vpop.f32.mrf.mxu0
        %v1446 = vpop.f32.mrf.mxu0
        %v1447 = vpop.f32.mrf.mxu0
        %1448 = vdwg.mxu0
        %v1450 = vsel %vm1310, %v969, 0
        %v1453 = vsel %vm1310, %v1139, 0
        %1455 = vmatprep.subr.bf16.mxu0 0
        %1456 = vmatpush1.bf16.xpose.msra.mxu0 0
        %1457 = vmatprep.subr.bf16.mxu0 0
        %1458 = vmatpush1.bf16.xpose.msra.mxu0 0
        %1459 = vmatprep.subr.bf16.mxu0 0
        %1460 = vmatpush1.bf16.xpose.msra.mxu0 0
        %1461 = vmatprep.subr.bf16.mxu0 0
        %1462 = vmatpush1.bf16.xpose.msra.mxu0 0
        %1463 = vmatprep.subr.bf16.mxu0 0
        %1464 = vmatpush1.bf16.xpose.msra.mxu0 0
        %1465 = vmatprep.subr.bf16.mxu0 0
        %1466 = vmatpush1.bf16.xpose.msra.mxu0 0
        %1467 = vmatprep.subr.bf16.mxu0 0
        %1468 = vmatpush1.bf16.xpose.msra.mxu0 0
        %1469 = vmatprep.subr.bf16.mxu0 0
        %1470 = vmatpush1.bf16.xpose.msra.mxu0 %v1453
        %1471 = vmatprep.subr.bf16.mxu0 0
        %1472 = vmatpush2.bf16.xpose.msra.mxu0 0
        %1473 = vmatprep.subr.bf16.mxu0 0
        %1474 = vmatpush2.bf16.xpose.msra.mxu0 0
        %1475 = vmatprep.subr.bf16.mxu0 0
        %1476 = vmatpush2.bf16.xpose.msra.mxu0 0
        %1477 = vmatprep.subr.bf16.mxu0 0
        %1478 = vmatpush2.bf16.xpose.msra.mxu0 0
        %1479 = vmatprep.subr.bf16.mxu0 0
        %1480 = vmatpush2.bf16.xpose.msra.mxu0 0
        %1481 = vmatprep.subr.bf16.mxu0 0
        %1482 = vmatpush2.bf16.xpose.msra.mxu0 0
        %1483 = vmatprep.subr.bf16.mxu0 0
        %1484 = vmatpush2.bf16.xpose.msra.mxu0 0
        %1485 = vmatprep.subr.bf16.mxu0 0
        %1486 = vmatpush2.bf16.xpose.msra.mxu0 0
        %1487 = vmatprep.mubr.bf16.mxu0 0
        %1488 = vmatmul.mubr.bf16.gmra.mxu0 %v1450
        %v1489 = vpop.f32.mrf.mxu0
        %v1490 = vadd.f32 0.0, %v1489
        %v1491 = vpop.f32.mrf.mxu0
        %v1492 = vpop.f32.mrf.mxu0
        %v1493 = vpop.f32.mrf.mxu0
        %1494 = vdwg.mxu0
        %v1495 = vsel %vm1310, %v1352, -inf
        %1496 = vmax.xlane.f32.xlu0 %v1495
        %v1497 = vpop.xlane.xlu0 %1496
        %v1498 = vsel %vm1310, %v1398, -inf
        %1499 = vmax.xlane.f32.xlu0 %v1498
        %v1500 = vpop.xlane.xlu0 %1499
        %v1501 = vsel %vm1310, %v1444, -inf
        %1502 = vmax.xlane.f32.xlu0 %v1501
        %v1503 = vpop.xlane.xlu0 %1502
        %v1504 = vsel %vm1310, %v1490, -inf
        %1505 = vmax.xlane.f32.xlu0 %v1504
        %v1506 = vpop.xlane.xlu0 %1505
        %v1507 = vsub.f32 %v1352, %v1497
        %v1508 = vsub.f32 %v1398, %v1500
        %v1509 = vsub.f32 %v1444, %v1503
        %v1510 = vsub.f32 %v1490, %v1506
        %v1511 = vpack.c.bf16 %v1507, %v1507
        %v1512 = vpack.c.bf16 %v1508, %v1508
        %v1513 = vpack.c.bf16 %v1509, %v1509
        %v1514 = vpack.c.bf16 %v1510, %v1510
        %v1516 = vmul.bf16 %v1511, 1069105081
        %v1517 = vpow.bf16.pop %v1516
        %v1519 = vmul.bf16 %v1512, 1069105081
        %v1520 = vpow.bf16.pop %v1519
        %v1522 = vmul.bf16 %v1513, 1069105081
        %v1523 = vpow.bf16.pop %v1522
        %v1525 = vmul.bf16 %v1514, 1069105081
        %v1526 = vpow.bf16.pop %v1525
        %v1527 = vunpack.c.l.bf16 %v1517
        %v1528 = vunpack.c.l.bf16 %v1520
        %v1529 = vunpack.c.l.bf16 %v1523
        %v1530 = vunpack.c.l.bf16 %v1526
        %v1531 = vsel %vm1310, %v1527, 0.0
        %1532 = vadd.xlane.f32.xlu0 %v1531
        %v1533 = vpop.xlane.xlu0 %1532
        %v1534 = vsel %vm1310, %v1528, 0.0
        %1535 = vadd.xlane.f32.xlu0 %v1534
        %v1536 = vpop.xlane.xlu0 %1535
        %v1537 = vsel %vm1310, %v1529, 0.0
        %1538 = vadd.xlane.f32.xlu0 %v1537
        %v1539 = vpop.xlane.xlu0 %1538
        %v1540 = vsel %vm1310, %v1530, 0.0
        %1541 = vadd.xlane.f32.xlu0 %v1540
        %v1542 = vpop.xlane.xlu0 %1541
        %v1544 = vsel %vm1310, %v1517, 0
        %vm1546 = vcmask 1043456
        %v1548 = vsel %vm1546, %v1300, 0
        %1550 = vmatprep.subr.bf16.mxu0 0
        %1551 = vmatpush1.bf16.msra.mxu0 0
        %1552 = vmatprep.subr.bf16.mxu0 0
        %1553 = vmatpush1.bf16.msra.mxu0 0
        %1554 = vmatprep.subr.bf16.mxu0 0
        %1555 = vmatpush1.bf16.msra.mxu0 0
        %1556 = vmatprep.subr.bf16.mxu0 0
        %1557 = vmatpush1.bf16.msra.mxu0 0
        %1558 = vmatprep.subr.bf16.mxu0 0
        %1559 = vmatpush1.bf16.msra.mxu0 0
        %1560 = vmatprep.subr.bf16.mxu0 0
        %1561 = vmatpush1.bf16.msra.mxu0 0
        %1562 = vmatprep.subr.bf16.mxu0 0
        %1563 = vmatpush1.bf16.msra.mxu0 0
        %1564 = vmatprep.subr.bf16.mxu0 0
        %1565 = vmatpush1.bf16.msra.mxu0 %v1548
        %1566 = vmatprep.subr.bf16.mxu0 0
        %1567 = vmatpush2.bf16.msra.mxu0 0
        %1568 = vmatprep.subr.bf16.mxu0 0
        %1569 = vmatpush2.bf16.msra.mxu0 0
        %1570 = vmatprep.subr.bf16.mxu0 0
        %1571 = vmatpush2.bf16.msra.mxu0 0
        %1572 = vmatprep.subr.bf16.mxu0 0
        %1573 = vmatpush2.bf16.msra.mxu0 0
        %1574 = vmatprep.subr.bf16.mxu0 0
        %1575 = vmatpush2.bf16.msra.mxu0 0
        %1576 = vmatprep.subr.bf16.mxu0 0
        %1577 = vmatpush2.bf16.msra.mxu0 0
        %1578 = vmatprep.subr.bf16.mxu0 0
        %1579 = vmatpush2.bf16.msra.mxu0 0
        %1580 = vmatprep.subr.bf16.mxu0 0
        %1581 = vmatpush2.bf16.msra.mxu0 0
        %1582 = vmatprep.mubr.bf16.mxu0 0
        %1583 = vmatmul.mubr.bf16.gmra.mxu0 %v1544
        %v1584 = vpop.f32.mrf.mxu0
        %v1585 = vadd.f32 0.0, %v1584
        %v1586 = vpop.f32.mrf.mxu0
        %v1587 = vpop.f32.mrf.mxu0
        %v1588 = vpop.f32.mrf.mxu0
        %1589 = vdwg.mxu0
        %v1591 = vsel %vm1310, %v1520, 0
        %v1594 = vsel %vm1546, %v1303, 0
        %1596 = vmatprep.subr.bf16.mxu0 0
        %1597 = vmatpush1.bf16.msra.mxu0 0
        %1598 = vmatprep.subr.bf16.mxu0 0
        %1599 = vmatpush1.bf16.msra.mxu0 0
        %1600 = vmatprep.subr.bf16.mxu0 0
        %1601 = vmatpush1.bf16.msra.mxu0 0
        %1602 = vmatprep.subr.bf16.mxu0 0
        %1603 = vmatpush1.bf16.msra.mxu0 0
        %1604 = vmatprep.subr.bf16.mxu0 0
        %1605 = vmatpush1.bf16.msra.mxu0 0
        %1606 = vmatprep.subr.bf16.mxu0 0
        %1607 = vmatpush1.bf16.msra.mxu0 0
        %1608 = vmatprep.subr.bf16.mxu0 0
        %1609 = vmatpush1.bf16.msra.mxu0 0
        %1610 = vmatprep.subr.bf16.mxu0 0
        %1611 = vmatpush1.bf16.msra.mxu0 %v1594
        %1612 = vmatprep.subr.bf16.mxu0 0
        %1613 = vmatpush2.bf16.msra.mxu0 0
        %1614 = vmatprep.subr.bf16.mxu0 0
        %1615 = vmatpush2.bf16.msra.mxu0 0
        %1616 = vmatprep.subr.bf16.mxu0 0
        %1617 = vmatpush2.bf16.msra.mxu0 0
        %1618 = vmatprep.subr.bf16.mxu0 0
        %1619 = vmatpush2.bf16.msra.mxu0 0
        %1620 = vmatprep.subr.bf16.mxu0 0
        %1621 = vmatpush2.bf16.msra.mxu0 0
        %1622 = vmatprep.subr.bf16.mxu0 0
        %1623 = vmatpush2.bf16.msra.mxu0 0
        %1624 = vmatprep.subr.bf16.mxu0 0
        %1625 = vmatpush2.bf16.msra.mxu0 0
        %1626 = vmatprep.subr.bf16.mxu0 0
        %1627 = vmatpush2.bf16.msra.mxu0 0
        %1628 = vmatprep.mubr.bf16.mxu0 0
        %1629 = vmatmul.mubr.bf16.gmra.mxu0 %v1591
        %v1630 = vpop.f32.mrf.mxu0
        %v1631 = vadd.f32 0.0, %v1630
        %v1632 = vpop.f32.mrf.mxu0
        %v1633 = vpop.f32.mrf.mxu0
        %v1634 = vpop.f32.mrf.mxu0
        %1635 = vdwg.mxu0
        %v1637 = vsel %vm1310, %v1523, 0
        %v1640 = vsel %vm1546, %v1306, 0
        %1642 = vmatprep.subr.bf16.mxu0 0
        %1643 = vmatpush1.bf16.msra.mxu0 0
        %1644 = vmatprep.subr.bf16.mxu0 0
        %1645 = vmatpush1.bf16.msra.mxu0 0
        %1646 = vmatprep.subr.bf16.mxu0 0
        %1647 = vmatpush1.bf16.msra.mxu0 0
        %1648 = vmatprep.subr.bf16.mxu0 0
        %1649 = vmatpush1.bf16.msra.mxu0 0
        %1650 = vmatprep.subr.bf16.mxu0 0
        %1651 = vmatpush1.bf16.msra.mxu0 0
        %1652 = vmatprep.subr.bf16.mxu0 0
        %1653 = vmatpush1.bf16.msra.mxu0 0
        %1654 = vmatprep.subr.bf16.mxu0 0
        %1655 = vmatpush1.bf16.msra.mxu0 0
        %1656 = vmatprep.subr.bf16.mxu0 0
        %1657 = vmatpush1.bf16.msra.mxu0 %v1640
        %1658 = vmatprep.subr.bf16.mxu0 0
        %1659 = vmatpush2.bf16.msra.mxu0 0
        %1660 = vmatprep.subr.bf16.mxu0 0
        %1661 = vmatpush2.bf16.msra.mxu0 0
        %1662 = vmatprep.subr.bf16.mxu0 0
        %1663 = vmatpush2.bf16.msra.mxu0 0
        %1664 = vmatprep.subr.bf16.mxu0 0
        %1665 = vmatpush2.bf16.msra.mxu0 0
        %1666 = vmatprep.subr.bf16.mxu0 0
        %1667 = vmatpush2.bf16.msra.mxu0 0
        %1668 = vmatprep.subr.bf16.mxu0 0
        %1669 = vmatpush2.bf16.msra.mxu0 0
        %1670 = vmatprep.subr.bf16.mxu0 0
        %1671 = vmatpush2.bf16.msra.mxu0 0
        %1672 = vmatprep.subr.bf16.mxu0 0
        %1673 = vmatpush2.bf16.msra.mxu0 0
        %1674 = vmatprep.mubr.bf16.mxu0 0
        %1675 = vmatmul.mubr.bf16.gmra.mxu0 %v1637
        %v1676 = vpop.f32.mrf.mxu0
        %v1677 = vadd.f32 0.0, %v1676
        %v1678 = vpop.f32.mrf.mxu0
        %v1679 = vpop.f32.mrf.mxu0
        %v1680 = vpop.f32.mrf.mxu0
        %1681 = vdwg.mxu0
        %v1683 = vsel %vm1310, %v1526, 0
        %v1686 = vsel %vm1546, %v1309, 0
        %1688 = vmatprep.subr.bf16.mxu0 0
        %1689 = vmatpush1.bf16.msra.mxu0 0
        %1690 = vmatprep.subr.bf16.mxu0 0
        %1691 = vmatpush1.bf16.msra.mxu0 0
        %1692 = vmatprep.subr.bf16.mxu0 0
        %1693 = vmatpush1.bf16.msra.mxu0 0
        %1694 = vmatprep.subr.bf16.mxu0 0
        %1695 = vmatpush1.bf16.msra.mxu0 0
        %1696 = vmatprep.subr.bf16.mxu0 0
        %1697 = vmatpush1.bf16.msra.mxu0 0
        %1698 = vmatprep.subr.bf16.mxu0 0
        %1699 = vmatpush1.bf16.msra.mxu0 0
        %1700 = vmatprep.subr.bf16.mxu0 0
        %1701 = vmatpush1.bf16.msra.mxu0 0
        %1702 = vmatprep.subr.bf16.mxu0 0
        %1703 = vmatpush1.bf16.msra.mxu0 %v1686
        %1704 = vmatprep.subr.bf16.mxu0 0
        %1705 = vmatpush2.bf16.msra.mxu0 0
        %1706 = vmatprep.subr.bf16.mxu0 0
        %1707 = vmatpush2.bf16.msra.mxu0 0
        %1708 = vmatprep.subr.bf16.mxu0 0
        %1709 = vmatpush2.bf16.msra.mxu0 0
        %1710 = vmatprep.subr.bf16.mxu0 0
        %1711 = vmatpush2.bf16.msra.mxu0 0
        %1712 = vmatprep.subr.bf16.mxu0 0
        %1713 = vmatpush2.bf16.msra.mxu0 0
        %1714 = vmatprep.subr.bf16.mxu0 0
        %1715 = vmatpush2.bf16.msra.mxu0 0
        %1716 = vmatprep.subr.bf16.mxu0 0
        %1717 = vmatpush2.bf16.msra.mxu0 0
        %1718 = vmatprep.subr.bf16.mxu0 0
        %1719 = vmatpush2.bf16.msra.mxu0 0
        %1720 = vmatprep.mubr.bf16.mxu0 0
        %1721 = vmatmul.mubr.bf16.gmra.mxu0 %v1683
        %v1722 = vpop.f32.mrf.mxu0
        %v1723 = vadd.f32 0.0, %v1722
        %v1724 = vpop.f32.mrf.mxu0
        %v1725 = vpop.f32.mrf.mxu0
        %v1726 = vpop.f32.mrf.mxu0
        %1727 = vdwg.mxu0
        %v1728 = vrcp.pop %v1533
        %v1729 = vrcp.pop %v1536
        %v1730 = vrcp.pop %v1539
        %v1731 = vrcp.pop %v1542
        %v1732 = vmul.f32 %v1585, %v1728
        %v1733 = vmul.f32 %v1631, %v1729
        %v1734 = vmul.f32 %v1677, %v1730
        %v1735 = vmul.f32 %v1723, %v1731
        %v1736 = vpack.c.bf16 %v1732, %v1732
        %v1738 = vunpack.c.l.s4 1983009808
        %v1739 = vunpack.c.0.s8 %v1738
        %v1740 = vlaneseq
        %v1741 = vshrl.u32 %v1740, 7
        %v1742 = vsub.s32 %v1739, %v1741
        %v1743 = vrot.slane %v1736, %v1742
        %v1744 = vpack.c.bf16 %v1734, %v1734
        %v1746 = vunpack.c.l.s4 1983009808
        %v1747 = vunpack.c.0.s8 %v1746
        %v1748 = vlaneseq
        %v1749 = vshrl.u32 %v1748, 7
        %v1750 = vsub.s32 %v1747, %v1749
        %v1751 = vrot.slane %v1744, %v1750
        %v1752 = vcombine.low %v1743, %v1751
        %v1753 = vcombine.high %v1743, %v1751
        %v1755 = vunpack.c.l.s4 1934713408
        %v1756 = vunpack.c.0.s8 %v1755
        %v1757 = vlaneseq
        %v1758 = vshrl.u32 %v1757, 7
        %v1759 = vsub.s32 %v1756, %v1758
        %v1760 = vrot.slane %v1752, %v1759
        %v1762 = vunpack.c.l.s4 1934713408
        %v1763 = vunpack.c.0.s8 %v1762
        %v1764 = vlaneseq
        %v1765 = vshrl.u32 %v1764, 7
        %v1766 = vsub.s32 %v1763, %v1765
        %v1767 = vrot.slane %v1753, %v1766
        %v1768 = vcombine.high %v1760, 0
        %v1769 = vcombine.high %v1767, 0
        %v1770 = vpack.c.bf16 %v1733, %v1733
        %v1772 = vunpack.c.l.s4 1983009808
        %v1773 = vunpack.c.0.s8 %v1772
        %v1774 = vlaneseq
        %v1775 = vshrl.u32 %v1774, 7
        %v1776 = vsub.s32 %v1773, %v1775
        %v1777 = vrot.slane %v1770, %v1776
        %v1778 = vpack.c.bf16 %v1735, %v1735
        %v1780 = vunpack.c.l.s4 1983009808
        %v1781 = vunpack.c.0.s8 %v1780
        %v1782 = vlaneseq
        %v1783 = vshrl.u32 %v1782, 7
        %v1784 = vsub.s32 %v1781, %v1783
        %v1785 = vrot.slane %v1778, %v1784
        %v1786 = vcombine.low %v1777, %v1785
        %v1787 = vcombine.high %v1777, %v1785
        %v1789 = vunpack.c.l.s4 1934713408
        %v1790 = vunpack.c.0.s8 %v1789
        %v1791 = vlaneseq
        %v1792 = vshrl.u32 %v1791, 7
        %v1793 = vsub.s32 %v1790, %v1792
        %v1794 = vrot.slane %v1786, %v1793
        %v1796 = vunpack.c.l.s4 1934713408
        %v1797 = vunpack.c.0.s8 %v1796
        %v1798 = vlaneseq
        %v1799 = vshrl.u32 %v1798, 7
        %v1800 = vsub.s32 %v1797, %v1799
        %v1801 = vrot.slane %v1787, %v1800
        %v1802 = vcombine.high %v1794, 0
        %v1803 = vcombine.high %v1801, 0
        %v1806 = vpack.i.b16 %v1794, %v1760
        %v1808 = vshrl.u32 %v1760, 16
        %v1809 = vshrl.u32 %v1794, 16
        %v1810 = vpack.i.b16 %v1809, %v1808
        %v1814 = vpack.i.b16 %v1802, %v1768
        %v1816 = vshrl.u32 %v1768, 16
        %v1817 = vshrl.u32 %v1802, 16
        %v1818 = vpack.i.b16 %v1817, %v1816
        %v1822 = vpack.i.b16 %v1801, %v1767
        %v1824 = vshrl.u32 %v1767, 16
        %v1825 = vshrl.u32 %v1801, 16
        %v1826 = vpack.i.b16 %v1825, %v1824
        %v1830 = vpack.i.b16 %v1803, %v1769
        %v1832 = vshrl.u32 %v1769, 16
        %v1833 = vshrl.u32 %v1803, 16
        %v1834 = vpack.i.b16 %v1833, %v1832
        %v1836 = vcombine.low %v1806, %v1822
        %v1838 = vunpack.c.l.s4 1983009808
        %v1839 = vunpack.c.0.s8 %v1838
        %v1840 = vlaneseq
        %v1841 = vshrl.u32 %v1840, 7
        %v1842 = vsub.s32 %v1839, %v1841
        %v1843 = vrot.slane %v1836, %v1842
        %v1844 = vcombine.low %v1814, %v1830
        %v1846 = vunpack.c.l.s4 1983009808
        %v1847 = vunpack.c.0.s8 %v1846
        %v1848 = vlaneseq
        %v1849 = vshrl.u32 %v1848, 7
        %v1850 = vsub.s32 %v1847, %v1849
        %v1851 = vrot.slane %v1844, %v1850
        %v1852 = vcombine.low %v1843, %v1851
        %v1854 = vunpack.c.l.s4 1934713408
        %v1855 = vunpack.c.0.s8 %v1854
        %v1856 = vlaneseq
        %v1857 = vshrl.u32 %v1856, 7
        %v1858 = vsub.s32 %v1855, %v1857
        %v1859 = vrot.slane %v1852, %v1858
        %v1860 = vcombine.high %v1859, 0
        %v1861 = vcombine.low %v1810, %v1826
        %v1863 = vunpack.c.l.s4 1983009808
        %v1864 = vunpack.c.0.s8 %v1863
        %v1865 = vlaneseq
        %v1866 = vshrl.u32 %v1865, 7
        %v1867 = vsub.s32 %v1864, %v1866
        %v1868 = vrot.slane %v1861, %v1867
        %v1869 = vcombine.low %v1818, %v1834
        %v1871 = vunpack.c.l.s4 1983009808
        %v1872 = vunpack.c.0.s8 %v1871
        %v1873 = vlaneseq
        %v1874 = vshrl.u32 %v1873, 7
        %v1875 = vsub.s32 %v1872, %v1874
        %v1876 = vrot.slane %v1869, %v1875
        %v1877 = vcombine.low %v1868, %v1876
        %v1879 = vunpack.c.l.s4 1934713408
        %v1880 = vunpack.c.0.s8 %v1879
        %v1881 = vlaneseq
        %v1882 = vshrl.u32 %v1881, 7
        %v1883 = vsub.s32 %v1880, %v1882
        %v1884 = vrot.slane %v1877, %v1883
        %v1885 = vcombine.high %v1884, 0
        %v1888 = vpack.i.b16 %v1884, %v1859
        %v1889 = vshrl.u32 %v1859, 16
        %v1890 = vshrl.u32 %v1884, 16
        %v1891 = vpack.i.b16 %v1890, %v1889
        %v1894 = vpack.i.b16 %v1885, %v1860
        %v1895 = vshrl.u32 %v1860, 16
        %v1896 = vshrl.u32 %v1885, 16
        %v1897 = vpack.i.b16 %v1896, %v1895
        %1898 = vrot.lane.b32.xlu0 %v1891, 8
        %v1899 = vpop.permute.xlu0 %1898
        %1900 = vrot.lane.b32.xlu0 %v1894, 16
        %v1901 = vpop.permute.xlu0 %1900
        %1902 = vrot.lane.b32.xlu0 %v1897, 24
        %v1903 = vpop.permute.xlu0 %1902
        %v1906 = vsel %vm1310, %v1888, %v1899
        %vm1907 = vcmask 130048
        %v1909 = vsel %vm1907, %v1906, %v1901
        %vm1910 = vcmask 195584
        %v1912 = vsel %vm1910, %v1909, %v1903
        %v1913 = vld [vmem:[%s668] sm:$0xf]
        %v1914 = vld [vmem:[%s668 + $0x4] sm:$0xf]
        %v1915 = vld [vmem:[%s668 + $0x8] sm:$0xf]
        %v1916 = vld [vmem:[%s668 + $0xc] sm:$0xf]
        %v1917 = vld [vmem:[%s671] sm:$0x1]
        %v1919 = vlaneseq
        %v1920 = vshrl.u32 %v1919, 7
        %v1921 = vsub.s32 0, %v1920
        %v1922 = vrot.slane %v1917, %v1921
        %v1928 = vunpack.c.l.b16 %v1913
        %v1929 = vunpack.c.l.b16 %v1914
        %v1930 = vunpack.c.l.b16 %v1915
        %v1931 = vunpack.c.l.b16 %v1916
        %v1932 = vpack.c.b16 %v1929, %v1928
        %v1933 = vpack.c.b16 %v1931, %v1930
        %v1936 = vsel %vm705, %v1912, 0
        %1938 = vmatprep.subr.bf16.mxu0 0
        %1939 = vmatpush1.bf16.msra.mxu0 0
        %1940 = vmatprep.subr.bf16.mxu0 0
        %1941 = vmatpush1.bf16.msra.mxu0 0
        %1942 = vmatprep.subr.bf16.mxu0 0
        %1943 = vmatpush1.bf16.msra.mxu0 0
        %1944 = vmatprep.subr.bf16.mxu0 0
        %1945 = vmatpush1.bf16.msra.mxu0 0
        %1946 = vmatprep.subr.bf16.mxu0 0
        %1947 = vmatpush1.bf16.msra.mxu0 0
        %1948 = vmatprep.subr.bf16.mxu0 0
        %1949 = vmatpush1.bf16.msra.mxu0 0
        %1950 = vmatprep.subr.bf16.mxu0 0
        %1951 = vmatpush1.bf16.msra.mxu0 %v1933
        %1952 = vmatprep.subr.bf16.mxu0 0
        %1953 = vmatpush1.bf16.msra.mxu0 %v1932
        %1954 = vmatprep.subr.bf16.mxu0 0
        %1955 = vmatpush2.bf16.msra.mxu0 0
        %1956 = vmatprep.subr.bf16.mxu0 0
        %1957 = vmatpush2.bf16.msra.mxu0 0
        %1958 = vmatprep.subr.bf16.mxu0 0
        %1959 = vmatpush2.bf16.msra.mxu0 0
        %1960 = vmatprep.subr.bf16.mxu0 0
        %1961 = vmatpush2.bf16.msra.mxu0 0
        %1962 = vmatprep.subr.bf16.mxu0 0
        %1963 = vmatpush2.bf16.msra.mxu0 0
        %1964 = vmatprep.subr.bf16.mxu0 0
        %1965 = vmatpush2.bf16.msra.mxu0 0
        %1966 = vmatprep.subr.bf16.mxu0 0
        %1967 = vmatpush2.bf16.msra.mxu0 0
        %1968 = vmatprep.subr.bf16.mxu0 0
        %1969 = vmatpush2.bf16.msra.mxu0 0
        %1970 = vmatprep.mubr.bf16.mxu0 0
        %1971 = vmatmul.mubr.bf16.gmra.mxu0 %v1936
        %v1972 = vpop.f32.mrf.mxu0
        %v1973 = vadd.f32 %v1922, %v1972
        %v1974 = vpop.f32.mrf.mxu0
        %v1975 = vpop.f32.mrf.mxu0
        %v1976 = vpop.f32.mrf.mxu0
        %1977 = vdwg.mxu0
        %v1978 = vadd.f32 %v702, %v1973
        %v1979 = vld [vmem:[%s674] sm:$0x1]
        %v1980 = vld [vmem:[%s677] sm:$0x1]
        %v1981 = vsel %vm705, %v1978, 0.0
        %1982 = vadd.xlane.f32.xlu0 %v1981
        %v1983 = vpop.xlane.xlu0 %1982
        %v1984 = vmul.f32 %v1983, %v709
        %v1985 = vsub.f32 %v1978, %v1984
        %v1986 = vmul.f32 %v1985, %v1985
        %v1987 = vsel %vm705, %v1986, 0.0
        %1988 = vadd.xlane.f32.xlu0 %v1987
        %v1989 = vpop.xlane.xlu0 %1988
        %v1990 = vmul.f32 %v1989, %v709
        %v1991 = vadd.f32 %v1990, 1e-06
        %v1992 = vrsqrt.pop %v1991
        %v1993 = vmul.f32 %v1985, %v1992
        %v1995 = vlaneseq
        %v1996 = vshrl.u32 %v1995, 7
        %v1997 = vsub.s32 0, %v1996
        %v1998 = vrot.slane %v1979, %v1997
        %v2000 = vmul.f32 %v1993, %v1998
        %v2002 = vlaneseq
        %v2003 = vshrl.u32 %v2002, 7
        %v2004 = vsub.s32 0, %v2003
        %v2005 = vrot.slane %v1980, %v2004
        %v2007 = vadd.f32 %v2000, %v2005
        %v2008 = vpack.c.bf16 %v2007, %v2007
        %v2009 = vld [vmem:[%s682] sm:$0xf]
        %v2010 = vld [vmem:[%s682 + $0x4] sm:$0xf]
        %v2011 = vld [vmem:[%s682 + $0x8] sm:$0xf]
        %v2012 = vld [vmem:[%s682 + $0xc] sm:$0xf]
        %v2013 = vld [vmem:[%s685] sm:$0x1]
        %v2015 = vlaneseq
        %v2016 = vshrl.u32 %v2015, 7
        %v2017 = vsub.s32 0, %v2016
        %v2018 = vrot.slane %v2013, %v2017
        %v2024 = vunpack.c.l.b16 %v2009
        %v2025 = vunpack.c.l.b16 %v2010
        %v2026 = vunpack.c.l.b16 %v2011
        %v2027 = vunpack.c.l.b16 %v2012
        %v2028 = vpack.c.b16 %v2025, %v2024
        %v2029 = vpack.c.b16 %v2027, %v2026
        %v2033 = vsel %vm705, %v2008, 0
        %2035 = vmatprep.subr.bf16.mxu0 0
        %2036 = vmatpush1.bf16.msra.mxu0 0
        %2037 = vmatprep.subr.bf16.mxu0 0
        %2038 = vmatpush1.bf16.msra.mxu0 0
        %2039 = vmatprep.subr.bf16.mxu0 0
        %2040 = vmatpush1.bf16.msra.mxu0 0
        %2041 = vmatprep.subr.bf16.mxu0 0
        %2042 = vmatpush1.bf16.msra.mxu0 0
        %2043 = vmatprep.subr.bf16.mxu0 0
        %2044 = vmatpush1.bf16.msra.mxu0 0
        %2045 = vmatprep.subr.bf16.mxu0 0
        %2046 = vmatpush1.bf16.msra.mxu0 0
        %2047 = vmatprep.subr.bf16.mxu0 0
        %2048 = vmatpush1.bf16.msra.mxu0 %v2029
        %2049 = vmatprep.subr.bf16.mxu0 0
        %2050 = vmatpush1.bf16.msra.mxu0 %v2028
        %2051 = vmatprep.subr.bf16.mxu0 0
        %2052 = vmatpush2.bf16.msra.mxu0 0
        %2053 = vmatprep.subr.bf16.mxu0 0
        %2054 = vmatpush2.bf16.msra.mxu0 0
        %2055 = vmatprep.subr.bf16.mxu0 0
        %2056 = vmatpush2.bf16.msra.mxu0 0
        %2057 = vmatprep.subr.bf16.mxu0 0
        %2058 = vmatpush2.bf16.msra.mxu0 0
        %2059 = vmatprep.subr.bf16.mxu0 0
        %2060 = vmatpush2.bf16.msra.mxu0 0
        %2061 = vmatprep.subr.bf16.mxu0 0
        %2062 = vmatpush2.bf16.msra.mxu0 0
        %2063 = vmatprep.subr.bf16.mxu0 0
        %2064 = vmatpush2.bf16.msra.mxu0 0
        %2065 = vmatprep.subr.bf16.mxu0 0
        %2066 = vmatpush2.bf16.msra.mxu0 0
        %2067 = vmatprep.mubr.bf16.mxu0 0
        %2068 = vmatmul.mubr.bf16.gmra.mxu0 %v2033
        %v2069 = vpop.f32.mrf.mxu0
        %v2070 = vadd.f32 %v2018, %v2069
        %v2071 = vpop.f32.mrf.mxu0
        %v2072 = vpop.f32.mrf.mxu0
        %v2073 = vpop.f32.mrf.mxu0
        %2074 = vdwg.mxu0
        %v2075 = vmul.f32 %v2070, 0.5
        %v2076 = vmul.f32 %v2070, 0.70710677
        %v2077 = verf.f32.pop %v2076
        %v2078 = vadd.f32 %v2077, 1.0
        %v2079 = vmul.f32 %v2075, %v2078
        %v2080 = vpack.c.bf16 %v2079, %v2079
        %v2081 = vld [vmem:[%s690] sm:$0xf]
        %v2082 = vld [vmem:[%s690 + $0x4] sm:$0xf]
        %v2083 = vld [vmem:[%s690 + $0x8] sm:$0xf]
        %v2084 = vld [vmem:[%s690 + $0xc] sm:$0xf]
        %v2085 = vld [vmem:[%s690 + $0x10] sm:$0xf]
        %v2086 = vld [vmem:[%s690 + $0x14] sm:$0xf]
        %v2087 = vld [vmem:[%s690 + $0x18] sm:$0xf]
        %v2088 = vld [vmem:[%s690 + $0x1c] sm:$0xf]
        %v2089 = vld [vmem:[%s690 + $0x20] sm:$0xf]
        %v2090 = vld [vmem:[%s690 + $0x24] sm:$0xf]
        %v2091 = vld [vmem:[%s690 + $0x28] sm:$0xf]
        %v2092 = vld [vmem:[%s690 + $0x2c] sm:$0xf]
        %v2093 = vld [vmem:[%s690 + $0x30] sm:$0xf]
        %v2094 = vld [vmem:[%s690 + $0x34] sm:$0xf]
        %v2095 = vld [vmem:[%s690 + $0x38] sm:$0xf]
        %v2096 = vld [vmem:[%s690 + $0x3c] sm:$0xf]
        %v2097 = vld [vmem:[%s693] sm:$0x1]
        %v2099 = vlaneseq
        %v2100 = vshrl.u32 %v2099, 7
        %v2101 = vsub.s32 0, %v2100
        %v2102 = vrot.slane %v2097, %v2101
        %v2120 = vunpack.c.l.b16 %v2081
        %v2121 = vunpack.c.l.b16 %v2082
        %v2122 = vunpack.c.l.b16 %v2083
        %v2123 = vunpack.c.l.b16 %v2084
        %v2124 = vunpack.c.l.b16 %v2085
        %v2125 = vunpack.c.l.b16 %v2086
        %v2126 = vunpack.c.l.b16 %v2087
        %v2127 = vunpack.c.l.b16 %v2088
        %v2128 = vunpack.c.l.b16 %v2089
        %v2129 = vunpack.c.l.b16 %v2090
        %v2130 = vunpack.c.l.b16 %v2091
        %v2131 = vunpack.c.l.b16 %v2092
        %v2132 = vunpack.c.l.b16 %v2093
        %v2133 = vunpack.c.l.b16 %v2094
        %v2134 = vunpack.c.l.b16 %v2095
        %v2135 = vunpack.c.l.b16 %v2096
        %v2136 = vpack.c.b16 %v2121, %v2120
        %v2137 = vpack.c.b16 %v2123, %v2122
        %v2138 = vpack.c.b16 %v2125, %v2124
        %v2139 = vpack.c.b16 %v2127, %v2126
        %v2140 = vpack.c.b16 %v2129, %v2128
        %v2141 = vpack.c.b16 %v2131, %v2130
        %v2142 = vpack.c.b16 %v2133, %v2132
        %v2143 = vpack.c.b16 %v2135, %v2134
        %2152 = vmatprep.subr.bf16.mxu0 0
        %2153 = vmatpush1.bf16.msra.mxu0 %v2143
        %2154 = vmatprep.subr.bf16.mxu0 0
        %2155 = vmatpush1.bf16.msra.mxu0 %v2142
        %2156 = vmatprep.subr.bf16.mxu0 0
        %2157 = vmatpush1.bf16.msra.mxu0 %v2141
        %2158 = vmatprep.subr.bf16.mxu0 0
        %2159 = vmatpush1.bf16.msra.mxu0 %v2140
        %2160 = vmatprep.subr.bf16.mxu0 0
        %2161 = vmatpush1.bf16.msra.mxu0 %v2139
        %2162 = vmatprep.subr.bf16.mxu0 0
        %2163 = vmatpush1.bf16.msra.mxu0 %v2138
        %2164 = vmatprep.subr.bf16.mxu0 0
        %2165 = vmatpush1.bf16.msra.mxu0 %v2137
        %2166 = vmatprep.subr.bf16.mxu0 0
        %2167 = vmatpush1.bf16.msra.mxu0 %v2136
        %2168 = vmatprep.subr.bf16.mxu0 0
        %2169 = vmatpush2.bf16.msra.mxu0 0
        %2170 = vmatprep.subr.bf16.mxu0 0
        %2171 = vmatpush2.bf16.msra.mxu0 0
        %2172 = vmatprep.subr.bf16.mxu0 0
        %2173 = vmatpush2.bf16.msra.mxu0 0
        %2174 = vmatprep.subr.bf16.mxu0 0
        %2175 = vmatpush2.bf16.msra.mxu0 0
        %2176 = vmatprep.subr.bf16.mxu0 0
        %2177 = vmatpush2.bf16.msra.mxu0 0
        %2178 = vmatprep.subr.bf16.mxu0 0
        %2179 = vmatpush2.bf16.msra.mxu0 0
        %2180 = vmatprep.subr.bf16.mxu0 0
        %2181 = vmatpush2.bf16.msra.mxu0 0
        %2182 = vmatprep.subr.bf16.mxu0 0
        %2183 = vmatpush2.bf16.msra.mxu0 0
        %2184 = vmatprep.mubr.bf16.mxu0 0
        %2185 = vmatmul.mubr.bf16.gmra.mxu0 %v2080
        %v2186 = vpop.f32.mrf.mxu0
        %v2187 = vadd.f32 %v2102, %v2186
        %v2188 = vpop.f32.mrf.mxu0
        %v2189 = vpop.f32.mrf.mxu0
        %v2190 = vpop.f32.mrf.mxu0
        %2191 = vdwg.mxu0
        %v2192 = vadd.f32 %v1978, %v2187
        %p2193 = scmp.eq.s32.totalorder %s34, 1
        // Predicated region
        $region85: #{tpu_custom_call.1} parent=79 // pred_check
          %p2194 = pneg %p2193
        $region86: #{tpu_custom_call.1} parent=79 // pred_check_branch
          %2196 = sbr.rel (%p2194) target = $region88
        $region87: #{tpu_custom_call.1} parent=79 // pred_region
          %v2197 = vld [vmem:[%s13] sm:$0x1]
          %v2198 = vld [vmem:[%s14] sm:$0x1]
          %v2199 = vsel %vm705, %v2192, 0.0
          %2200 = vadd.xlane.f32.xlu0 %v2199
          %v2201 = vpop.xlane.xlu0 %2200
          %v2202 = vmul.f32 %v2201, %v709
          %v2203 = vsub.f32 %v2192, %v2202
          %v2204 = vmul.f32 %v2203, %v2203
          %v2205 = vsel %vm705, %v2204, 0.0
          %2206 = vadd.xlane.f32.xlu0 %v2205
          %v2207 = vpop.xlane.xlu0 %2206
          %v2208 = vmul.f32 %v2207, %v709
          %v2209 = vadd.f32 %v2208, 1e-06
          %v2210 = vrsqrt.pop %v2209
          %v2211 = vmul.f32 %v2203, %v2210
          %v2213 = vlaneseq
          %v2214 = vshrl.u32 %v2213, 7
          %v2215 = vsub.s32 0, %v2214
          %v2216 = vrot.slane %v2197, %v2215
          %v2218 = vmul.f32 %v2211, %v2216
          %v2220 = vlaneseq
          %v2221 = vshrl.u32 %v2220, 7
          %v2222 = vsub.s32 0, %v2221
          %v2223 = vrot.slane %v2198, %v2222
          %v2225 = vadd.f32 %v2218, %v2223
          %2226 = vst.msk [vmem:[%s645] sm:$0xff] %vm705, %v2225
        $region88: #{tpu_custom_call.1} parent=79 // pred_fallthru
          _
        %p2227 = scmp.ne.s32.totalorder %s34, 1
        // Predicated region
        $region89: #{tpu_custom_call.1} parent=79 // pred_check
          %p2228 = pneg %p2227
        $region90: #{tpu_custom_call.1} parent=79 // pred_check_branch
          %2230 = sbr.rel (%p2228) target = $region92
        $region91: #{tpu_custom_call.1} parent=79 // pred_region
          %2231 = vst.msk [vmem:[%s645] sm:$0xff] %vm705, %v2192
        $region92: #{tpu_custom_call.1} parent=79 // pred_fallthru
          _
        %s2232 = sand.u32 %s429, 1
        %s2233 = scalar_lea.sflag [#allocation3], %s2232
        %s2234 = sand.u32 %s429, 1
        %s2235 = smul.addr %s2234, 8
        %s2236 = scalar_lea.vmem [#allocation2], %s2235
        // Predicated region
        $region93: #{tpu_custom_call.1} parent=79 // pred_check
          %p2237 = pneg %p439
        $region94: #{tpu_custom_call.1} parent=79 // pred_check_branch
          %2239 = sbr.rel (%p2237) target = $region96
        $region95: #{tpu_custom_call.1} parent=79 // pred_region
          %s2241 = ssub.s32 128, 128
          %2242 = vsyncadd %s2233, %s2241
          %s2243 = smul.addr %s33, 128
          %s2244 = scalar_lea.hbm %s15, %s2243
          %s2246 = sshll.u32 %s2236, 4
          %s2247 = int_to_ptr.vmem [resolvable:$true] %s2246
          %2249 = dma.vmem_to_hbm [thread:$0]  %s2247, 128, %s2244, %s2233
        $region96: #{tpu_custom_call.1} parent=79 // pred_fallthru
          _
      $region80: #{tpu_custom_call.1} parent=5 // pred_fallthru
        _
      %p2250 = scmp.le.s32.totalorder 2, %s24
      // Predicated region
      $region97: #{tpu_custom_call.1} parent=5 // pred_check
        %p2251 = pneg %p2250
      $region98: #{tpu_custom_call.1} parent=5 // pred_check_branch
        %2253 = sbr.rel (%p2251) target = $region100
      $region99: #{tpu_custom_call.1} parent=5 // pred_region
        %s2254 = ssub.s32 %s24, 2
        // Predicated region
        $region101: #{tpu_custom_call.1} parent=99 // pred_check
          %p2255 = pneg %p445
        $region102: #{tpu_custom_call.1} parent=99 // pred_check_branch
          %2257 = sbr.rel (%p2255) target = $region104
        $region103: #{tpu_custom_call.1} parent=99 // pred_region
          %s2258 = sand.u32 %s430, 1
          %s2259 = scalar_lea.sflag [#allocation3], %s2258
          %s2260 = sand.u32 %s430, 1
          %s2261 = smul.addr %s2260, 8
          %s2262 = scalar_lea.vmem [#allocation2], %s2261
          %2263 = dma.done %s2259, 128
        $region104: #{tpu_custom_call.1} parent=99 // pred_fallthru
          _
      $region100: #{tpu_custom_call.1} parent=5 // pred_fallthru
        _
    $region6: #{tpu_custom_call.1} parent=1 // loop_footer
      %s28 = sadd.s32 1, %s24
    $region7: #{tpu_custom_call.1} parent=1 // loop_footer_branch
      %23 = sbr.rel target = $region3
    $region8: #{tpu_custom_call.1} parent=1 // loop_exit
      _
    %2264 = vsyncpa [#allocation3], 1
    %s2265 = scalar_lea.sflag [#allocation3], 1
    %2266 = vsyncpa %s2265, 1

</llo_original>
